<compile_context>
chip_gen: v7x
topology: tpu7x:2x2x1
jax: 0.10.0
libtpu: 0.0.40
codegen_flags: <defaults>
</compile_context>

<pallas_src>
import math

import jax
import jax.numpy as jnp
from jax import lax
from jax.experimental import pallas as pl
from jax.experimental.pallas import tpu as pltpu


# ----------------------------- Pallas kernel --------------------------------
def generator_kernel(labels_ref, noise_ref, table1_ref, w1n_ref,
                     w2_ref, v2_ref,
                     w3_ref, v3_ref,
                     w4_hbm_ref, v4_ref,
                     w5_hbm_ref, b5_ref,
                     out_ref,
                     w4_vmem, w5_vmem, dma_sems):
    B = noise_ref.shape[0]
    ncls = table1_ref.shape[0]

    # Kick off the HBM->VMEM streams for the two big late-layer weights so they
    # overlap with layers 1-3; they are not needed until the 4th / 5th matmul.
    w4_copy = pltpu.make_async_copy(w4_hbm_ref, w4_vmem, dma_sems.at[0])
    w5_copy = pltpu.make_async_copy(w5_hbm_ref, w5_vmem, dma_sems.at[1])
    w4_copy.start()
    w5_copy.start()

    def leaky_relu(h):
        return jnp.where(h > 0, h, 0.2 * h)

    def linear_bf16(h, w):
        # bf16 x bf16 MXU matmul with f32 accumulation
        return jnp.dot(h.astype(jnp.bfloat16), w,
                       preferred_element_type=jnp.float32)

    def bn_leaky(z, vec_ref):
        # vec_ref rows: [bias, gamma, beta], all f32.
        # Training-mode BatchNorm1d: biased batch stats, eps = 0.8 (as in the
        # reference nn.BatchNorm1d(out_feat, 0.8) -- not a typo), f32 math,
        # normalize+affine folded into one FMA pass: y = z*s + t.
        z = z + vec_ref[0:1, :]
        mean = jnp.mean(z, axis=0, keepdims=True)
        var = jnp.mean((z - mean) ** 2, axis=0, keepdims=True)
        s = vec_ref[1:2, :] * lax.rsqrt(var + 0.8)
        t = vec_ref[2:3, :] - mean * s
        return leaky_relu(z * s + t)

    # --- layer 1: Linear(latent+ncls, 128), no BN ---
    # Embedding + embedding-rows-of-W1 + b1 were folded offline into table1
    # (ncls, 128), so the lookup is a single tiny one-hot matmul and the noise
    # part is one bf16 MXU matmul.  (Out-of-range labels -> zero row; undefined
    # in PyTorch's nn.Embedding anyway.)
    class_iota = lax.broadcasted_iota(jnp.int32, (B, ncls), 1)
    onehot = (labels_ref[...] == class_iota).astype(jnp.float32)
    h = leaky_relu(
        jnp.dot(onehot, table1_ref[...], preferred_element_type=jnp.float32)
        + linear_bf16(noise_ref[...], w1n_ref[...]))

    # --- layers 2-4: Linear -> BatchNorm1d(eps=0.8) -> LeakyReLU(0.2) ---
    h = bn_leaky(linear_bf16(h, w2_ref[...]), v2_ref)    # 128  -> 256
    h = bn_leaky(linear_bf16(h, w3_ref[...]), v3_ref)    # 256  -> 512
    w4_copy.wait()
    h = bn_leaky(linear_bf16(h, w4_vmem[...]), v4_ref)   # 512  -> 1024

    # --- layer 5: Linear(1024, prod(img_shape)) -> Tanh (f32) ---
    w5_copy.wait()
    out_ref[...] = jnp.tanh(linear_bf16(h, w5_vmem[...]) + b5_ref[...])


# ------------------------------ parameters ----------------------------------
def init_params(key, latent_dim, n_classes, img_shape):
    """Deterministic PyTorch-style init.

    Linear weights stored transposed (in_features, out_features) and cast to
    bf16 for streaming; biases / BN affine kept in f32.  Embedding + the
    embedding rows of W1 + b1 are folded into a single (n_classes, 128) f32
    table.  w5/b5 are padded to a lane-dense (multiple of 128) output width.
    """
    out_dim = int(math.prod(img_shape))
    out_dim_pad = max(128, -(-out_dim // 128) * 128)

    dims = [latent_dim + n_classes, 128, 256, 512, 1024, out_dim]

    # Embedding(n_classes, n_classes) ~ N(0, 1)
    key, sub = jax.random.split(key)
    emb = jax.random.normal(sub, (n_classes, n_classes), jnp.float32)

    ws, bs = [], []
    for i in range(5):
        fan_in, fan_out = dims[i], dims[i + 1]
        bound = 1.0 / math.sqrt(fan_in)
        key, kw, kb = jax.random.split(key, 3)
        ws.append(jax.random.uniform(kw, (fan_in, fan_out), jnp.float32,
                                     -bound, bound))
        bs.append(jax.random.uniform(kb, (1, fan_out), jnp.float32,
                                     -bound, bound))

    params = {}

    # Layer 1 (concat order [embedding, noise]):
    #   Linear(concat(emb_row, noise)) == emb_row @ W1[:ncls] + noise @ W1[ncls:] + b1
    # Fold Embedding + W1[:ncls] + b1 into one exact f32 table.
    params["table1"] = emb @ ws[0][:n_classes, :] + bs[0]          # (ncls, 128) f32
    params["w1n"] = ws[0][n_classes:, :].astype(jnp.bfloat16)      # (latent, 128)

    # Layers 2-4: weight in bf16; [bias, gamma, beta] packed into one (3,N) f32.
    for li, d in zip((2, 3, 4), (256, 512, 1024)):
        params[f"w{li}"] = ws[li - 1].astype(jnp.bfloat16)
        params[f"v{li}"] = jnp.concatenate(
            [bs[li - 1],                       # bias
             jnp.ones((1, d), jnp.float32),    # gamma
             jnp.zeros((1, d), jnp.float32)],  # beta
            axis=0)

    # Layer 5, padded to a lane-dense output width (no-op when already %128==0).
    w5, b5 = ws[4], bs[4]
    if out_dim_pad != out_dim:
        w5 = jnp.pad(w5, ((0, 0), (0, out_dim_pad - out_dim)))
        b5 = jnp.pad(b5, ((0, 0), (0, out_dim_pad - out_dim)))
    params["w5"] = w5.astype(jnp.bfloat16)
    params["b5"] = b5

    # TODO(synk): per-generation weight compression (fp8 on v7x, int8 on
    # v5e/v6e) with scales folded into BN s / b5 would halve the dominant
    # weight DMA again; kept bf16 here for portability/accuracy.
    return params


# ------------------------------- wrapper -------------------------------------
def generator_forward(params, noise, labels, img_shape):
    batch = noise.shape[0]
    out_dim = int(math.prod(img_shape))
    out_dim_pad = params["w5"].shape[1]

    labels_2d = labels.astype(jnp.int32).reshape(batch, 1)

    kernel_args = (
        labels_2d, noise, params["table1"], params["w1n"],
        params["w2"], params["v2"],
        params["w3"], params["v3"],
        params["w4"], params["v4"],
        params["w5"], params["b5"],
    )

    vmem = pl.BlockSpec(memory_space=pltpu.MemorySpace.VMEM)
    hbm = pl.BlockSpec(memory_space=pl.ANY)   # w4 / w5 streamed manually
    in_specs = [vmem, vmem, vmem, vmem,       # labels, noise, table1, w1n
                vmem, vmem, vmem, vmem,       # w2, v2, w3, v3
                hbm, vmem,                    # w4 (ANY), v4
                hbm, vmem]                    # w5 (ANY), b5

    flat_img = pl.pallas_call(
        generator_kernel,
        out_shape=jax.ShapeDtypeStruct((batch, out_dim_pad), jnp.float32),
        in_specs=in_specs,
        out_specs=vmem,
        scratch_shapes=[
            pltpu.VMEM(params["w4"].shape, jnp.bfloat16),   # w4 staging
            pltpu.VMEM(params["w5"].shape, jnp.bfloat16),   # w5 staging
            pltpu.SemaphoreType.DMA((2,)),
        ],
        # Real footprint is ~2-3 MiB; 16 MiB leaves headroom on all generations
        # while staying far below v7x's 64 MiB per-core VMEM.
        compiler_params=pltpu.CompilerParams(vmem_limit_bytes=16 << 20),
    )(*kernel_args)

    if out_dim_pad != out_dim:
        flat_img = flat_img[:, :out_dim]

    # img.view(B, *img_shape)  -> NCHW
    return flat_img.reshape((batch,) + tuple(img_shape))


# --------------------------------- main --------------------------------------
if __name__ == "__main__":
    latent_dim = 32
    n_classes = 8
    img_shape = (1, 16, 16)   # (C, H, W) -> out_dim = 256 (lane-dense output)
    # Kernel is weight-DMA bound: per-sample cost is ~flat until batch ~128-256,
    # so real callers should batch up; kept small here for the demo.
    batch = 8

    key = jax.random.PRNGKey(0)
    kp, kn, kl = jax.random.split(key, 3)

    params = init_params(kp, latent_dim, n_classes, img_shape)
    noise = jax.random.normal(kn, (batch, latent_dim), jnp.float32)
    labels = jax.random.randint(kl, (batch,), 0, n_classes, jnp.int32)

    img = generator_forward(params, noise, labels, img_shape)
    img = jax.block_until_ready(img)

    assert img.shape == (batch,) + img_shape
    assert bool(jnp.all(jnp.isfinite(img)))
    assert bool(jnp.all(jnp.abs(img) <= 1.0))   # tanh output range
    print("KERNEL_OK")
</pallas_src>

<mosaic_0001>
module attributes {stable_mosaic.version = 11 : i64} {
  func.func @generator_kernel(%arg0: memref<8x1xi32, #tpu.memory_space<vmem>>, %arg1: memref<8x32xf32, #tpu.memory_space<vmem>>, %arg2: memref<8x128xf32, #tpu.memory_space<vmem>>, %arg3: memref<32x128xbf16, #tpu.memory_space<vmem>>, %arg4: memref<128x256xbf16, #tpu.memory_space<vmem>>, %arg5: memref<3x256xf32, #tpu.memory_space<vmem>>, %arg6: memref<256x512xbf16, #tpu.memory_space<vmem>>, %arg7: memref<3x512xf32, #tpu.memory_space<vmem>>, %arg8: memref<512x1024xbf16, #tpu.memory_space<any>>, %arg9: memref<3x1024xf32, #tpu.memory_space<vmem>>, %arg10: memref<1024x256xbf16, #tpu.memory_space<any>>, %arg11: memref<1x256xf32, #tpu.memory_space<vmem>>, %arg12: memref<8x256xf32, #tpu.memory_space<vmem>>, %arg13: memref<512x1024xbf16, #tpu.memory_space<vmem>>, %arg14: memref<1024x256xbf16, #tpu.memory_space<vmem>>, %arg15: memref<2x!tpu.dma_semaphore, #tpu.memory_space<semaphore_mem>>) attributes {dimension_semantics = [], scalar_prefetch = 0 : i64, scratch_operands = 3 : i64, tpu.core_type = #tpu.core_type<tc>} {
    %c0_i32 = arith.constant 0 : i32
    %0 = tpu.memref_slice %arg15[%c0_i32] : memref<2x!tpu.dma_semaphore, #tpu.memory_space<semaphore_mem>> -> memref<1x!tpu.dma_semaphore, #tpu.memory_space<semaphore_mem>>
    %1 = tpu.memref_squeeze %0 : memref<1x!tpu.dma_semaphore, #tpu.memory_space<semaphore_mem>> -> memref<!tpu.dma_semaphore, #tpu.memory_space<semaphore_mem>>
    tpu.enqueue_dma source(%arg8 : memref<512x1024xbf16, #tpu.memory_space<any>>) target(%arg13 : memref<512x1024xbf16, #tpu.memory_space<vmem>>) target_semaphore(%1 : memref<!tpu.dma_semaphore, #tpu.memory_space<semaphore_mem>>)
    %c1_i32 = arith.constant 1 : i32
    %2 = tpu.memref_slice %arg15[%c1_i32] : memref<2x!tpu.dma_semaphore, #tpu.memory_space<semaphore_mem>> -> memref<1x!tpu.dma_semaphore, #tpu.memory_space<semaphore_mem>>
    %3 = tpu.memref_squeeze %2 : memref<1x!tpu.dma_semaphore, #tpu.memory_space<semaphore_mem>> -> memref<!tpu.dma_semaphore, #tpu.memory_space<semaphore_mem>>
    tpu.enqueue_dma source(%arg10 : memref<1024x256xbf16, #tpu.memory_space<any>>) target(%arg14 : memref<1024x256xbf16, #tpu.memory_space<vmem>>) target_semaphore(%3 : memref<!tpu.dma_semaphore, #tpu.memory_space<semaphore_mem>>)
    %4 = tpu.iota {dimensions = array<i32: 1>} : vector<8x8xi32>
    %c0 = arith.constant 0 : index
    %c0_0 = arith.constant 0 : index
    %5 = vector.load %arg0[%c0, %c0_0] : memref<8x1xi32, #tpu.memory_space<vmem>>, vector<8x1xi32>
    %6 = vector.broadcast %5 : vector<8x1xi32> to vector<8x8xi32>
    %7 = arith.cmpi eq, %6, %4 : vector<8x8xi32>
    %8 = arith.extui %7 : vector<8x8xi1> to vector<8x8xi32>
    %9 = arith.sitofp %8 : vector<8x8xi32> to vector<8x8xf32>
    %c0_1 = arith.constant 0 : index
    %c0_2 = arith.constant 0 : index
    %10 = vector.load %arg2[%c0_1, %c0_2] : memref<8x128xf32, #tpu.memory_space<vmem>>, vector<8x128xf32>
    %cst = arith.constant dense<0.000000e+00> : vector<8x128xf32>
    %11 = tpu.matmul %9, %10, %cst {dimension_numbers = #tpu.dot_dimension_numbers<[1], [0], [0], [1], [0, 0, 1, 1], [], []>} : vector<8x8xf32>, vector<8x128xf32>, vector<8x128xf32> -> vector<8x128xf32>
    %c0_3 = arith.constant 0 : index
    %c0_4 = arith.constant 0 : index
    %12 = vector.load %arg1[%c0_3, %c0_4] : memref<8x32xf32, #tpu.memory_space<vmem>>, vector<8x32xf32>
    %c0_5 = arith.constant 0 : index
    %c0_6 = arith.constant 0 : index
    %13 = vector.load %arg3[%c0_5, %c0_6] : memref<32x128xbf16, #tpu.memory_space<vmem>>, vector<32x128xbf16>
    %14 = arith.truncf %12 : vector<8x32xf32> to vector<8x32xbf16>
    %cst_7 = arith.constant dense<0.000000e+00> : vector<8x128xf32>
    %15 = tpu.matmul %14, %13, %cst_7 {dimension_numbers = #tpu.dot_dimension_numbers<[1], [0], [0], [1], [0, 0, 1, 1], [], []>} : vector<8x32xbf16>, vector<32x128xbf16>, vector<8x128xf32> -> vector<8x128xf32>
    %16 = arith.addf %11, %15 : vector<8x128xf32>
    %cst_8 = arith.constant 0.000000e+00 : f32
    %17 = vector.broadcast %cst_8 : f32 to vector<8x128xf32>
    %18 = arith.cmpf ogt, %16, %17 : vector<8x128xf32>
    %cst_9 = arith.constant 2.000000e-01 : f32
    %19 = vector.broadcast %cst_9 : f32 to vector<8x128xf32>
    %20 = arith.mulf %19, %16 : vector<8x128xf32>
    %21 = arith.select %18, %16, %20 : vector<8x128xi1>, vector<8x128xf32>
    %c0_10 = arith.constant 0 : index
    %c0_11 = arith.constant 0 : index
    %22 = vector.load %arg4[%c0_10, %c0_11] : memref<128x256xbf16, #tpu.memory_space<vmem>>, vector<128x256xbf16>
    %23 = arith.truncf %21 : vector<8x128xf32> to vector<8x128xbf16>
    %cst_12 = arith.constant dense<0.000000e+00> : vector<8x256xf32>
    %24 = tpu.matmul %23, %22, %cst_12 {dimension_numbers = #tpu.dot_dimension_numbers<[1], [0], [0], [1], [0, 0, 1, 1], [], []>} : vector<8x128xbf16>, vector<128x256xbf16>, vector<8x256xf32> -> vector<8x256xf32>
    %c0_13 = arith.constant 0 : index
    %c0_14 = arith.constant 0 : index
    %25 = vector.load %arg5[%c0_13, %c0_14] : memref<3x256xf32, #tpu.memory_space<vmem>>, vector<1x256xf32>
    %26 = vector.broadcast %25 : vector<1x256xf32> to vector<8x256xf32>
    %27 = arith.addf %24, %26 : vector<8x256xf32>
    %cst_15 = arith.constant dense<0.000000e+00> : vector<256xf32>
    %28 = vector.multi_reduction <add>, %27, %cst_15 [0] : vector<8x256xf32> to vector<256xf32>
    %29 = vector.shape_cast %28 : vector<256xf32> to vector<1x256xf32>
    %cst_16 = arith.constant 8.000000e+00 : f32
    %30 = vector.broadcast %cst_16 : f32 to vector<1x256xf32>
    %31 = arith.divf %29, %30 : vector<1x256xf32>
    %32 = vector.broadcast %31 : vector<1x256xf32> to vector<8x256xf32>
    %33 = arith.subf %27, %32 : vector<8x256xf32>
    %34 = arith.mulf %33, %33 : vector<8x256xf32>
    %cst_17 = arith.constant dense<0.000000e+00> : vector<256xf32>
    %35 = vector.multi_reduction <add>, %34, %cst_17 [0] : vector<8x256xf32> to vector<256xf32>
    %36 = vector.shape_cast %35 : vector<256xf32> to vector<1x256xf32>
    %cst_18 = arith.constant 8.000000e+00 : f32
    %37 = vector.broadcast %cst_18 : f32 to vector<1x256xf32>
    %38 = arith.divf %36, %37 : vector<1x256xf32>
    %c1 = arith.constant 1 : index
    %c0_19 = arith.constant 0 : index
    %39 = vector.load %arg5[%c1, %c0_19] : memref<3x256xf32, #tpu.memory_space<vmem>>, vector<1x256xf32>
    %cst_20 = arith.constant 8.000000e-01 : f32
    %40 = vector.broadcast %cst_20 : f32 to vector<1x256xf32>
    %41 = arith.addf %38, %40 : vector<1x256xf32>
    %42 = math.rsqrt %41 : vector<1x256xf32>
    %43 = arith.mulf %39, %42 : vector<1x256xf32>
    %c2 = arith.constant 2 : index
    %c0_21 = arith.constant 0 : index
    %44 = vector.load %arg5[%c2, %c0_21] : memref<3x256xf32, #tpu.memory_space<vmem>>, vector<1x256xf32>
    %45 = arith.mulf %31, %43 : vector<1x256xf32>
    %46 = arith.subf %44, %45 : vector<1x256xf32>
    %47 = vector.broadcast %43 : vector<1x256xf32> to vector<8x256xf32>
    %48 = arith.mulf %27, %47 : vector<8x256xf32>
    %49 = vector.broadcast %46 : vector<1x256xf32> to vector<8x256xf32>
    %50 = arith.addf %48, %49 : vector<8x256xf32>
    %cst_22 = arith.constant 0.000000e+00 : f32
    %51 = vector.broadcast %cst_22 : f32 to vector<8x256xf32>
    %52 = arith.cmpf ogt, %50, %51 : vector<8x256xf32>
    %cst_23 = arith.constant 2.000000e-01 : f32
    %53 = vector.broadcast %cst_23 : f32 to vector<8x256xf32>
    %54 = arith.mulf %53, %50 : vector<8x256xf32>
    %55 = arith.select %52, %50, %54 : vector<8x256xi1>, vector<8x256xf32>
    %c0_24 = arith.constant 0 : index
    %c0_25 = arith.constant 0 : index
    %56 = vector.load %arg6[%c0_24, %c0_25] : memref<256x512xbf16, #tpu.memory_space<vmem>>, vector<256x512xbf16>
    %57 = arith.truncf %55 : vector<8x256xf32> to vector<8x256xbf16>
    %cst_26 = arith.constant dense<0.000000e+00> : vector<8x512xf32>
    %58 = tpu.matmul %57, %56, %cst_26 {dimension_numbers = #tpu.dot_dimension_numbers<[1], [0], [0], [1], [0, 0, 1, 1], [], []>} : vector<8x256xbf16>, vector<256x512xbf16>, vector<8x512xf32> -> vector<8x512xf32>
    %c0_27 = arith.constant 0 : index
    %c0_28 = arith.constant 0 : index
    %59 = vector.load %arg7[%c0_27, %c0_28] : memref<3x512xf32, #tpu.memory_space<vmem>>, vector<1x512xf32>
    %60 = vector.broadcast %59 : vector<1x512xf32> to vector<8x512xf32>
    %61 = arith.addf %58, %60 : vector<8x512xf32>
    %cst_29 = arith.constant dense<0.000000e+00> : vector<512xf32>
    %62 = vector.multi_reduction <add>, %61, %cst_29 [0] : vector<8x512xf32> to vector<512xf32>
    %63 = vector.shape_cast %62 : vector<512xf32> to vector<1x512xf32>
    %cst_30 = arith.constant 8.000000e+00 : f32
    %64 = vector.broadcast %cst_30 : f32 to vector<1x512xf32>
    %65 = arith.divf %63, %64 : vector<1x512xf32>
    %66 = vector.broadcast %65 : vector<1x512xf32> to vector<8x512xf32>
    %67 = arith.subf %61, %66 : vector<8x512xf32>
    %68 = arith.mulf %67, %67 : vector<8x512xf32>
    %cst_31 = arith.constant dense<0.000000e+00> : vector<512xf32>
    %69 = vector.multi_reduction <add>, %68, %cst_31 [0] : vector<8x512xf32> to vector<512xf32>
    %70 = vector.shape_cast %69 : vector<512xf32> to vector<1x512xf32>
    %cst_32 = arith.constant 8.000000e+00 : f32
    %71 = vector.broadcast %cst_32 : f32 to vector<1x512xf32>
    %72 = arith.divf %70, %71 : vector<1x512xf32>
    %c1_33 = arith.constant 1 : index
    %c0_34 = arith.constant 0 : index
    %73 = vector.load %arg7[%c1_33, %c0_34] : memref<3x512xf32, #tpu.memory_space<vmem>>, vector<1x512xf32>
    %cst_35 = arith.constant 8.000000e-01 : f32
    %74 = vector.broadcast %cst_35 : f32 to vector<1x512xf32>
    %75 = arith.addf %72, %74 : vector<1x512xf32>
    %76 = math.rsqrt %75 : vector<1x512xf32>
    %77 = arith.mulf %73, %76 : vector<1x512xf32>
    %c2_36 = arith.constant 2 : index
    %c0_37 = arith.constant 0 : index
    %78 = vector.load %arg7[%c2_36, %c0_37] : memref<3x512xf32, #tpu.memory_space<vmem>>, vector<1x512xf32>
    %79 = arith.mulf %65, %77 : vector<1x512xf32>
    %80 = arith.subf %78, %79 : vector<1x512xf32>
    %81 = vector.broadcast %77 : vector<1x512xf32> to vector<8x512xf32>
    %82 = arith.mulf %61, %81 : vector<8x512xf32>
    %83 = vector.broadcast %80 : vector<1x512xf32> to vector<8x512xf32>
    %84 = arith.addf %82, %83 : vector<8x512xf32>
    %cst_38 = arith.constant 0.000000e+00 : f32
    %85 = vector.broadcast %cst_38 : f32 to vector<8x512xf32>
    %86 = arith.cmpf ogt, %84, %85 : vector<8x512xf32>
    %cst_39 = arith.constant 2.000000e-01 : f32
    %87 = vector.broadcast %cst_39 : f32 to vector<8x512xf32>
    %88 = arith.mulf %87, %84 : vector<8x512xf32>
    %89 = arith.select %86, %84, %88 : vector<8x512xi1>, vector<8x512xf32>
    %c0_i32_40 = arith.constant 0 : i32
    %90 = tpu.memref_slice %arg15[%c0_i32_40] : memref<2x!tpu.dma_semaphore, #tpu.memory_space<semaphore_mem>> -> memref<1x!tpu.dma_semaphore, #tpu.memory_space<semaphore_mem>>
    %91 = tpu.memref_squeeze %90 : memref<1x!tpu.dma_semaphore, #tpu.memory_space<semaphore_mem>> -> memref<!tpu.dma_semaphore, #tpu.memory_space<semaphore_mem>>
    tpu.wait_dma2 semaphore(%91 : memref<!tpu.dma_semaphore, #tpu.memory_space<semaphore_mem>>) src(%arg8 : memref<512x1024xbf16, #tpu.memory_space<any>>) dst(%arg13 : memref<512x1024xbf16, #tpu.memory_space<vmem>>)
    %c0_41 = arith.constant 0 : index
    %c0_42 = arith.constant 0 : index
    %92 = vector.load %arg13[%c0_41, %c0_42] : memref<512x1024xbf16, #tpu.memory_space<vmem>>, vector<512x1024xbf16>
    %93 = arith.truncf %89 : vector<8x512xf32> to vector<8x512xbf16>
    %cst_43 = arith.constant dense<0.000000e+00> : vector<8x1024xf32>
    %94 = tpu.matmul %93, %92, %cst_43 {dimension_numbers = #tpu.dot_dimension_numbers<[1], [0], [0], [1], [0, 0, 1, 1], [], []>} : vector<8x512xbf16>, vector<512x1024xbf16>, vector<8x1024xf32> -> vector<8x1024xf32>
    %c0_44 = arith.constant 0 : index
    %c0_45 = arith.constant 0 : index
    %95 = vector.load %arg9[%c0_44, %c0_45] : memref<3x1024xf32, #tpu.memory_space<vmem>>, vector<1x1024xf32>
    %96 = vector.broadcast %95 : vector<1x1024xf32> to vector<8x1024xf32>
    %97 = arith.addf %94, %96 : vector<8x1024xf32>
    %cst_46 = arith.constant dense<0.000000e+00> : vector<1024xf32>
    %98 = vector.multi_reduction <add>, %97, %cst_46 [0] : vector<8x1024xf32> to vector<1024xf32>
    %99 = vector.shape_cast %98 : vector<1024xf32> to vector<1x1024xf32>
    %cst_47 = arith.constant 8.000000e+00 : f32
    %100 = vector.broadcast %cst_47 : f32 to vector<1x1024xf32>
    %101 = arith.divf %99, %100 : vector<1x1024xf32>
    %102 = vector.broadcast %101 : vector<1x1024xf32> to vector<8x1024xf32>
    %103 = arith.subf %97, %102 : vector<8x1024xf32>
    %104 = arith.mulf %103, %103 : vector<8x1024xf32>
    %cst_48 = arith.constant dense<0.000000e+00> : vector<1024xf32>
    %105 = vector.multi_reduction <add>, %104, %cst_48 [0] : vector<8x1024xf32> to vector<1024xf32>
    %106 = vector.shape_cast %105 : vector<1024xf32> to vector<1x1024xf32>
    %cst_49 = arith.constant 8.000000e+00 : f32
    %107 = vector.broadcast %cst_49 : f32 to vector<1x1024xf32>
    %108 = arith.divf %106, %107 : vector<1x1024xf32>
    %c1_50 = arith.constant 1 : index
    %c0_51 = arith.constant 0 : index
    %109 = vector.load %arg9[%c1_50, %c0_51] : memref<3x1024xf32, #tpu.memory_space<vmem>>, vector<1x1024xf32>
    %cst_52 = arith.constant 8.000000e-01 : f32
    %110 = vector.broadcast %cst_52 : f32 to vector<1x1024xf32>
    %111 = arith.addf %108, %110 : vector<1x1024xf32>
    %112 = math.rsqrt %111 : vector<1x1024xf32>
    %113 = arith.mulf %109, %112 : vector<1x1024xf32>
    %c2_53 = arith.constant 2 : index
    %c0_54 = arith.constant 0 : index
    %114 = vector.load %arg9[%c2_53, %c0_54] : memref<3x1024xf32, #tpu.memory_space<vmem>>, vector<1x1024xf32>
    %115 = arith.mulf %101, %113 : vector<1x1024xf32>
    %116 = arith.subf %114, %115 : vector<1x1024xf32>
    %117 = vector.broadcast %113 : vector<1x1024xf32> to vector<8x1024xf32>
    %118 = arith.mulf %97, %117 : vector<8x1024xf32>
    %119 = vector.broadcast %116 : vector<1x1024xf32> to vector<8x1024xf32>
    %120 = arith.addf %118, %119 : vector<8x1024xf32>
    %cst_55 = arith.constant 0.000000e+00 : f32
    %121 = vector.broadcast %cst_55 : f32 to vector<8x1024xf32>
    %122 = arith.cmpf ogt, %120, %121 : vector<8x1024xf32>
    %cst_56 = arith.constant 2.000000e-01 : f32
    %123 = vector.broadcast %cst_56 : f32 to vector<8x1024xf32>
    %124 = arith.mulf %123, %120 : vector<8x1024xf32>
    %125 = arith.select %122, %120, %124 : vector<8x1024xi1>, vector<8x1024xf32>
    %c1_i32_57 = arith.constant 1 : i32
    %126 = tpu.memref_slice %arg15[%c1_i32_57] : memref<2x!tpu.dma_semaphore, #tpu.memory_space<semaphore_mem>> -> memref<1x!tpu.dma_semaphore, #tpu.memory_space<semaphore_mem>>
    %127 = tpu.memref_squeeze %126 : memref<1x!tpu.dma_semaphore, #tpu.memory_space<semaphore_mem>> -> memref<!tpu.dma_semaphore, #tpu.memory_space<semaphore_mem>>
    tpu.wait_dma2 semaphore(%127 : memref<!tpu.dma_semaphore, #tpu.memory_space<semaphore_mem>>) src(%arg10 : memref<1024x256xbf16, #tpu.memory_space<any>>) dst(%arg14 : memref<1024x256xbf16, #tpu.memory_space<vmem>>)
    %c0_58 = arith.constant 0 : index
    %c0_59 = arith.constant 0 : index
    %128 = vector.load %arg14[%c0_58, %c0_59] : memref<1024x256xbf16, #tpu.memory_space<vmem>>, vector<1024x256xbf16>
    %129 = arith.truncf %125 : vector<8x1024xf32> to vector<8x1024xbf16>
    %cst_60 = arith.constant dense<0.000000e+00> : vector<8x256xf32>
    %130 = tpu.matmul %129, %128, %cst_60 {dimension_numbers = #tpu.dot_dimension_numbers<[1], [0], [0], [1], [0, 0, 1, 1], [], []>} : vector<8x1024xbf16>, vector<1024x256xbf16>, vector<8x256xf32> -> vector<8x256xf32>
    %c0_61 = arith.constant 0 : index
    %c0_62 = arith.constant 0 : index
    %131 = vector.load %arg11[%c0_61, %c0_62] : memref<1x256xf32, #tpu.memory_space<vmem>>, vector<1x256xf32>
    %132 = vector.broadcast %131 : vector<1x256xf32> to vector<8x256xf32>
    %133 = arith.addf %130, %132 : vector<8x256xf32>
    %134 = math.tanh %133 : vector<8x256xf32>
    %c0_63 = arith.constant 0 : index
    %c0_64 = arith.constant 0 : index
    %135 = vector.load %arg12[%c0_63, %c0_64] : memref<8x256xf32, #tpu.memory_space<vmem>>, vector<8x256xf32>
    tpu.vector_store %arg12[%c0_63, %c0_64], %134 {strides = array<i32>} : memref<8x256xf32, #tpu.memory_space<vmem>>, vector<8x256xf32>,
    return
  }
}

</mosaic_0001>

<llo_original>
// kernel: tpu_custom_call.1
$region0: #{tpu_custom_call.1}
  #allocation0 [shape = 'u32[]', space=smem, size = 0x4, offset = 0x4, fixed_abs, tag = 'smem constant byte address 0x4 - core index']
  #allocation1 [shape = 'u32[144,128]{1,0:T(1,128)}', space=vmem, size = 0x12000, scoped, tag = 'internal scratch']
  #allocation2 [shape = 'bf16[512,1024]{1,0:T(16,128)(2,1)}', space=vmem, size = 0x100000, scoped, tag = 'scratch operand']
  #allocation3 [shape = 'bf16[1024,256]{1,0:T(16,128)(2,1)}', space=vmem, size = 0x80000, scoped, tag = 'scratch operand']
  #allocation4 [shape = 's32[2]{0}', space=sflag, size = 0x8, scoped, tag = 'scratch operand']
  #allocation17 [shape = 's32[]', space=sflag, size = 0x4, offset = 0, fixed_abs, tag = 'sflag constant byte address 0x0 - dummy sync flag']
  #allocation19 [shape = 's32[]', space=sflag, size = 0x4, offset = 0, fixed_abs, tag = 'sflag constant byte address 0x0 - dummy sync flag']
  %s0 = inlined_call_operand.vmem [shape: s32[8,1], index: 0, kind: input, shape index: {}]
  %s1 = inlined_call_operand.vmem [shape: f32[8,32], index: 1, kind: input, shape index: {}]
  %s2 = inlined_call_operand.hbm [shape: f32[8,128], index: 2, kind: input, shape index: {}]
  %s3 = inlined_call_operand.hbm [shape: bf16[32,128], index: 3, kind: input, shape index: {}]
  %s4 = inlined_call_operand.hbm [shape: bf16[128,256], index: 4, kind: input, shape index: {}]
  %s5 = inlined_call_operand.hbm [shape: f32[3,256], index: 5, kind: input, shape index: {}]
  %s6 = inlined_call_operand.hbm [shape: bf16[256,512], index: 6, kind: input, shape index: {}]
  %s7 = inlined_call_operand.hbm [shape: f32[3,512], index: 7, kind: input, shape index: {}]
  %s8 = inlined_call_operand.hbm [shape: bf16[512,1024], index: 8, kind: input, shape index: {}]
  %s9 = inlined_call_operand.vmem [shape: f32[3,1024], index: 9, kind: input, shape index: {}]
  %s10 = inlined_call_operand.hbm [shape: bf16[1024,256], index: 10, kind: input, shape index: {}]
  %s11 = inlined_call_operand.vmem [shape: f32[1,256], index: 11, kind: input, shape index: {}]
  %s12 = inlined_call_operand.hbm [shape: f32[8,256], index: 12, kind: output, shape index: {}]
  %s13 = sld [smem:[#allocation0]]
  $region74: #{tpu_custom_call.1} parent=0
    _
  %s15 = ssub.s32 1, %s13
  %s16 = scalar_select 0, %s15, %s13
  $region1: #{tpu_custom_call.1} parent=0
    #allocation5 [shape = 'u8[4096]{0}', space=vmem, size = 0x1000, scoped, tag = 'input window, operand 2, single buffered']
    #allocation6 [shape = 's32[1]{0}', space=sflag, size = 0x4, scoped, tag = 'scoped memory for tpu_custom_call.1']
    #allocation7 [shape = 's32[1]{0}', space=sflag, size = 0x4, scoped, tag = 'scoped memory for tpu_custom_call.1']
    #allocation8 [shape = 'u8[8192]{0}', space=vmem, size = 0x2000, scoped, tag = 'input window, operand 3, single buffered']
    #allocation9 [shape = 's32[1]{0}', space=sflag, size = 0x4, scoped, tag = 'scoped memory for tpu_custom_call.1']
    #allocation10 [shape = 'u8[65536]{0}', space=vmem, size = 0x10000, scoped, tag = 'input window, operand 4, single buffered']
    #allocation11 [shape = 'u8[4096]{0}', space=vmem, size = 0x1000, scoped, tag = 'input window, operand 5, single buffered']
    #allocation12 [shape = 's32[1]{0}', space=sflag, size = 0x4, scoped, tag = 'scoped memory for tpu_custom_call.1']
    #allocation13 [shape = 'u8[262144]{0}', space=vmem, size = 0x40000, scoped, tag = 'input window, operand 6, single buffered']
    #allocation14 [shape = 'u8[8192]{0}', space=vmem, size = 0x2000, scoped, tag = 'input window, operand 7, single buffered']
    #allocation15 [shape = 's32[1]{0}', space=sflag, size = 0x4, scoped, tag = 'scoped memory for tpu_custom_call.1']
    #allocation16 [shape = 'u8[8192]{0}', space=vmem, size = 0x2000, scoped, tag = 'output window, operand 0, single buffered']
    #allocation18 [shape = 'u32[9]{0}', space=smem, size = 0x24, scoped, tag = 'DMA stride descriptor']
    #allocation20 [shape = 'u32[9]{0}', space=smem, size = 0x24, scoped, tag = 'DMA stride descriptor']
    %17 = vsyncpa [#allocation6], 0
    %18 = vsyncpa [#allocation9], 0
    %19 = vsyncpa [#allocation12], 0
    %20 = vsyncpa [#allocation15], 0
    %21 = vsyncpa [#allocation7], 0
    // Predicated region
    $region2: #{tpu_custom_call.1} parent=1 // pred_check
      _
    $region3: #{tpu_custom_call.1} parent=1 // pred_check_branch
      %23 = sbr.rel (0) target = $region5
    $region4: #{tpu_custom_call.1} parent=1 // pred_region
      _
    $region5: #{tpu_custom_call.1} parent=1 // pred_fallthru
      _
    // Predicated region
    $region6: #{tpu_custom_call.1} parent=1 // pred_check
      _
    $region7: #{tpu_custom_call.1} parent=1 // pred_check_branch
      %25 = sbr.rel (0) target = $region9
    $region8: #{tpu_custom_call.1} parent=1 // pred_region
      _
    $region9: #{tpu_custom_call.1} parent=1 // pred_fallthru
      _
    // Predicated region
    $region10: #{tpu_custom_call.1} parent=1 // pred_check
      _
    $region11: #{tpu_custom_call.1} parent=1 // pred_check_branch
      %27 = sbr.rel (0) target = $region13
    $region12: #{tpu_custom_call.1} parent=1 // pred_region
      %s29 = ssub.s32 128, 128
      %30 = vsyncadd [#allocation6], %s29
      %s32 = sshll.u32 [#allocation5], 4
      %s33 = int_to_ptr.vmem [resolvable:$true] %s32
      %35 = dma.hbm_to_vmem [thread:$0]  %s2, 128, %s33, [#allocation6]
    $region13: #{tpu_custom_call.1} parent=1 // pred_fallthru
      _
    // Predicated region
    $region14: #{tpu_custom_call.1} parent=1 // pred_check
      _
    $region15: #{tpu_custom_call.1} parent=1 // pred_check_branch
      %37 = sbr.rel (0) target = $region17
    $region16: #{tpu_custom_call.1} parent=1 // pred_region
      %s39 = ssub.s32 256, 256
      %40 = vsyncadd [#allocation9], %s39
      %s41 = sshll.u32 [#allocation8], 4
      %s42 = int_to_ptr.vmem [resolvable:$true] %s41
      %47 = dma.hbm_to_vmem [thread:$0]  %s3, 256, %s42, [#allocation9], 64, 64, 4
    $region17: #{tpu_custom_call.1} parent=1 // pred_fallthru
      _
    // Predicated region
    $region18: #{tpu_custom_call.1} parent=1 // pred_check
      _
    $region19: #{tpu_custom_call.1} parent=1 // pred_check_branch
      %49 = sbr.rel (0) target = $region21
    $region20: #{tpu_custom_call.1} parent=1 // pred_region
      %s51 = ssub.s32 2048, 2048
      %52 = vsyncadd [#allocation9], %s51
      %s53 = sshll.u32 [#allocation10], 4
      %s54 = int_to_ptr.vmem [resolvable:$true] %s53
      %59 = dma.hbm_to_vmem [thread:$0]  %s4, 2048, %s54, [#allocation9], 128, 128, 8
    $region21: #{tpu_custom_call.1} parent=1 // pred_fallthru
      _
    // Predicated region
    $region22: #{tpu_custom_call.1} parent=1 // pred_check
      _
    $region23: #{tpu_custom_call.1} parent=1 // pred_check_branch
      %61 = sbr.rel (0) target = $region25
    $region24: #{tpu_custom_call.1} parent=1 // pred_region
      %s63 = ssub.s32 128, 128
      %64 = vsyncadd [#allocation12], %s63
      %s66 = sshll.u32 [#allocation11], 4
      %s67 = int_to_ptr.vmem [resolvable:$true] %s66
      %69 = dma.hbm_to_vmem [thread:$0]  %s5, 128, %s67, [#allocation12]
    $region25: #{tpu_custom_call.1} parent=1 // pred_fallthru
      _
    // Predicated region
    $region26: #{tpu_custom_call.1} parent=1 // pred_check
      _
    $region27: #{tpu_custom_call.1} parent=1 // pred_check_branch
      %71 = sbr.rel (0) target = $region29
    $region28: #{tpu_custom_call.1} parent=1 // pred_region
      %s73 = ssub.s32 8192, 8192
      %74 = vsyncadd [#allocation12], %s73
      %s75 = sshll.u32 [#allocation13], 4
      %s76 = int_to_ptr.vmem [resolvable:$true] %s75
      %81 = dma.hbm_to_vmem [thread:$0]  %s6, 8192, %s76, [#allocation12], 256, 256, 16
    $region29: #{tpu_custom_call.1} parent=1 // pred_fallthru
      _
    // Predicated region
    $region30: #{tpu_custom_call.1} parent=1 // pred_check
      _
    $region31: #{tpu_custom_call.1} parent=1 // pred_check_branch
      %83 = sbr.rel (0) target = $region33
    $region32: #{tpu_custom_call.1} parent=1 // pred_region
      %s85 = ssub.s32 256, 256
      %86 = vsyncadd [#allocation15], %s85
      %s88 = sshll.u32 [#allocation14], 4
      %s89 = int_to_ptr.vmem [resolvable:$true] %s88
      %91 = dma.hbm_to_vmem [thread:$0]  %s7, 256, %s89, [#allocation15]
    $region33: #{tpu_custom_call.1} parent=1 // pred_fallthru
      _
    // Predicated region
    $region34: #{tpu_custom_call.1} parent=1 // pred_check
      _
    $region35: #{tpu_custom_call.1} parent=1 // pred_check_branch
      %93 = sbr.rel (0) target = $region37
    $region36: #{tpu_custom_call.1} parent=1 // pred_region
      _
    $region37: #{tpu_custom_call.1} parent=1 // pred_fallthru
      _
    // Predicated region
    $region38: #{tpu_custom_call.1} parent=1 // pred_check
      _
    $region39: #{tpu_custom_call.1} parent=1 // pred_check_branch
      %95 = sbr.rel (0) target = $region41
    $region40: #{tpu_custom_call.1} parent=1 // pred_region
      _
    $region41: #{tpu_custom_call.1} parent=1 // pred_fallthru
      _
    // Predicated region
    $region42: #{tpu_custom_call.1} parent=1 // pred_check
      _
    $region43: #{tpu_custom_call.1} parent=1 // pred_check_branch
      %97 = sbr.rel (0) target = $region45
    $region44: #{tpu_custom_call.1} parent=1 // pred_region
      %98 = dma.done [#allocation6], 128
    $region45: #{tpu_custom_call.1} parent=1 // pred_fallthru
      _
    // Predicated region
    $region46: #{tpu_custom_call.1} parent=1 // pred_check
      _
    $region47: #{tpu_custom_call.1} parent=1 // pred_check_branch
      %100 = sbr.rel (0) target = $region49
    $region48: #{tpu_custom_call.1} parent=1 // pred_region
      %101 = dma.done [#allocation9], 256
    $region49: #{tpu_custom_call.1} parent=1 // pred_fallthru
      _
    // Predicated region
    $region50: #{tpu_custom_call.1} parent=1 // pred_check
      _
    $region51: #{tpu_custom_call.1} parent=1 // pred_check_branch
      %103 = sbr.rel (0) target = $region53
    $region52: #{tpu_custom_call.1} parent=1 // pred_region
      %104 = dma.done [#allocation9], 2048
    $region53: #{tpu_custom_call.1} parent=1 // pred_fallthru
      _
    // Predicated region
    $region54: #{tpu_custom_call.1} parent=1 // pred_check
      _
    $region55: #{tpu_custom_call.1} parent=1 // pred_check_branch
      %106 = sbr.rel (0) target = $region57
    $region56: #{tpu_custom_call.1} parent=1 // pred_region
      %107 = dma.done [#allocation12], 128
    $region57: #{tpu_custom_call.1} parent=1 // pred_fallthru
      _
    // Predicated region
    $region58: #{tpu_custom_call.1} parent=1 // pred_check
      _
    $region59: #{tpu_custom_call.1} parent=1 // pred_check_branch
      %109 = sbr.rel (0) target = $region61
    $region60: #{tpu_custom_call.1} parent=1 // pred_region
      %110 = dma.done [#allocation12], 8192
    $region61: #{tpu_custom_call.1} parent=1 // pred_fallthru
      _
    // Predicated region
    $region62: #{tpu_custom_call.1} parent=1 // pred_check
      _
    $region63: #{tpu_custom_call.1} parent=1 // pred_check_branch
      %112 = sbr.rel (0) target = $region65
    $region64: #{tpu_custom_call.1} parent=1 // pred_region
      %113 = dma.done [#allocation15], 256
    $region65: #{tpu_custom_call.1} parent=1 // pred_fallthru
      _
    %s116 = sshll.u32 1, 14
    %s117 = sxor.u32 4294967295, %s116
    %s119 = sld [smem:[#allocation0]]
    %s120 = sadd.s32 2, %s119
    %s122 = sshll.u32 7, 26
    %s123 = sxor.u32 4294967295, %s122
    %s124 = sand.u32 0, %s123
    %s125 = sshll.u32 %s120, 26
    %s126 = sor.u32 %s124, %s125
    %s127 = sshll.u32 [#allocation2], 4
    %s128 = int_to_ptr.vmem [resolvable:$true] %s127
    %131 = sst [smem:[#allocation18]] 1024
    %s132 = scalar_lea.smem [#allocation18], 1
    %133 = sst [smem:[%s132]] 1024
    %s134 = scalar_lea.smem [#allocation18], 2
    %135 = sst [smem:[%s134]] 8
    %s136 = scalar_lea.smem [#allocation18], 3
    %137 = sst [smem:[%s136]] 64
    %s138 = scalar_lea.smem [#allocation18], 4
    %139 = sst [smem:[%s138]] 128
    %s140 = scalar_lea.smem [#allocation18], 5
    %141 = sst [smem:[%s140]] 2
    %s142 = scalar_lea.smem [#allocation18], 6
    %143 = sst [smem:[%s142]] 512
    %s144 = scalar_lea.smem [#allocation18], 7
    %145 = sst [smem:[%s144]] 64
    %s146 = scalar_lea.smem [#allocation18], 8
    %147 = sst [smem:[%s146]] 4
    %149 = dma.general %s8, 32768, %s128, [#allocation4], [#allocation17], [#allocation18], %s126, 0
    %s150 = scalar_lea.sflag [#allocation4], 1
    %s152 = sshll.u32 1, 14
    %s153 = sxor.u32 4294967295, %s152
    %s155 = sadd.s32 2, %s119
    %s157 = sshll.u32 7, 26
    %s158 = sxor.u32 4294967295, %s157
    %s159 = sand.u32 0, %s158
    %s160 = sshll.u32 %s155, 26
    %s161 = sor.u32 %s159, %s160
    %s162 = sshll.u32 [#allocation3], 4
    %s163 = int_to_ptr.vmem [resolvable:$true] %s162
    %166 = sst [smem:[#allocation20]] 256
    %s167 = scalar_lea.smem [#allocation20], 1
    %168 = sst [smem:[%s167]] 256
    %s169 = scalar_lea.smem [#allocation20], 2
    %170 = sst [smem:[%s169]] 2
    %s171 = scalar_lea.smem [#allocation20], 3
    %172 = sst [smem:[%s171]] 64
    %s173 = scalar_lea.smem [#allocation20], 4
    %174 = sst [smem:[%s173]] 128
    %s175 = scalar_lea.smem [#allocation20], 5
    %176 = sst [smem:[%s175]] 2
    %s177 = scalar_lea.smem [#allocation20], 6
    %178 = sst [smem:[%s177]] 128
    %s179 = scalar_lea.smem [#allocation20], 7
    %180 = sst [smem:[%s179]] 64
    %s181 = scalar_lea.smem [#allocation20], 8
    %182 = sst [smem:[%s181]] 4
    %184 = dma.general %s10, 16384, %s163, %s150, [#allocation19], [#allocation20], %s161, 0
    %v185 = vlaneseq
    %v186 = vand.u32 %v185, 127
    %v187 = vld [vmem:[%s0] sm:$0xff]
    %188 = vset.pattern.permute.xlu0 0
    %189 = vperm.xlu0 %188, %v187
    %v190 = vpop.permute.xlu0 %189
    %vm191 = vcmp.eq.s32.totalorder %v190, %v186
    %v192 = vsel %vm191, 1, 0
    %v193 = vcvt.s32.f32 %v192
    %v194 = vld [vmem:[#allocation5] sm:$0xff]
    %v195 = vld [vmem:[%s1] sm:$0xff]
    %v196 = vld [vmem:[#allocation8] sm:$0xf]
    %v197 = vld [vmem:[#allocation8 + $0x4] sm:$0xf]
    %v198 = vld [vmem:[#allocation8 + $0x8] sm:$0xf]
    %v199 = vld [vmem:[#allocation8 + $0xc] sm:$0xf]
    %v200 = vpack.c.bf16 %v195, %v195
    %v205 = vunpack.c.l.b16 %v196
    %v206 = vunpack.c.l.b16 %v197
    %v207 = vunpack.c.l.b16 %v198
    %v208 = vunpack.c.l.b16 %v199
    %v209 = vpack.c.b16 %v206, %v205
    %v210 = vpack.c.b16 %v208, %v207
    %vm213 = vcmask 261120
    %v215 = vsel %vm213, %v200, 0
    %217 = vmatprep.subr.bf16.mxu0 0
    %218 = vmatpush1.bf16.msra.mxu0 %v209
    %219 = vmatprep.subr.bf16.mxu0 0
    %220 = vmatpush1.bf16.msra.mxu0 %v210
    %221 = vmatprep.subr.bf16.mxu0 0
    %222 = vmatpush1.bf16.msra.mxu0 0
    %223 = vmatprep.subr.bf16.mxu0 0
    %224 = vmatpush1.bf16.msra.mxu0 0
    %225 = vmatprep.subr.bf16.mxu0 0
    %226 = vmatpush1.bf16.msra.mxu0 0
    %227 = vmatprep.subr.bf16.mxu0 0
    %228 = vmatpush1.bf16.msra.mxu0 0
    %229 = vmatprep.subr.bf16.mxu0 0
    %230 = vmatpush1.bf16.msra.mxu0 0
    %231 = vmatprep.subr.bf16.mxu0 0
    %232 = vmatpush1.bf16.msra.mxu0 0
    %233 = vmatprep.subr.bf16.mxu0 0
    %234 = vmatpush1.bf16.msra.mxu0 0
    %235 = vmatprep.subr.bf16.mxu0 0
    %236 = vmatpush1.bf16.msra.mxu0 0
    %237 = vmatprep.subr.bf16.mxu0 0
    %238 = vmatpush1.bf16.msra.mxu0 0
    %239 = vmatprep.subr.bf16.mxu0 0
    %240 = vmatpush1.bf16.msra.mxu0 0
    %241 = vmatprep.subr.bf16.mxu0 0
    %242 = vmatpush1.bf16.msra.mxu0 0
    %243 = vmatprep.subr.bf16.mxu0 0
    %244 = vmatpush1.bf16.msra.mxu0 0
    %245 = vmatprep.subr.bf16.mxu0 0
    %246 = vmatpush1.bf16.msra.mxu0 0
    %247 = vmatprep.subr.bf16.mxu0 0
    %248 = vmatpush1.bf16.msra.mxu0 0
    %249 = vmatprep.mubr.bf16.mxu0 0
    %250 = vmatmul.mubr.bf16.gmra.mrb[0].mxu0 %v215
    %v251 = vpop.f32.mrb[0].mxu0
    %v252 = vadd.f32 0.0, %v251
    %v253 = vpop.f32.mrb[0].mxu0
    %v254 = vpop.f32.mrb[0].mxu0
    %v255 = vpop.f32.mrb[0].mxu0
    %256 = vdwg.mxu0
    %vm257 = vcmask 64512
    %v259 = vsel %vm257, %v193, 0
    %261 = vmatprep.subr.mxu0 0.0
    %262 = vmatpush1.msra.mxu0 %v194
    %263 = vmatprep.subr.mxu0 0.0
    %264 = vmatpush1.msra.mxu0 0.0
    %265 = vmatprep.subr.mxu0 0.0
    %266 = vmatpush1.msra.mxu0 0.0
    %267 = vmatprep.subr.mxu0 0.0
    %268 = vmatpush1.msra.mxu0 0.0
    %269 = vmatprep.subr.mxu0 0.0
    %270 = vmatpush1.msra.mxu0 0.0
    %271 = vmatprep.subr.mxu0 0.0
    %272 = vmatpush1.msra.mxu0 0.0
    %273 = vmatprep.subr.mxu0 0.0
    %274 = vmatpush1.msra.mxu0 0.0
    %275 = vmatprep.subr.mxu0 0.0
    %276 = vmatpush1.msra.mxu0 0.0
    %277 = vmatprep.subr.mxu0 0.0
    %278 = vmatpush1.msra.mxu0 0.0
    %279 = vmatprep.subr.mxu0 0.0
    %280 = vmatpush1.msra.mxu0 0.0
    %281 = vmatprep.subr.mxu0 0.0
    %282 = vmatpush1.msra.mxu0 0.0
    %283 = vmatprep.subr.mxu0 0.0
    %284 = vmatpush1.msra.mxu0 0.0
    %285 = vmatprep.subr.mxu0 0.0
    %286 = vmatpush1.msra.mxu0 0.0
    %287 = vmatprep.subr.mxu0 0.0
    %288 = vmatpush1.msra.mxu0 0.0
    %289 = vmatprep.subr.mxu0 0.0
    %290 = vmatpush1.msra.mxu0 0.0
    %291 = vmatprep.subr.mxu0 0.0
    %292 = vmatpush1.msra.mxu0 0.0
    %293 = vmatprep.subr.mxu0 0.0
    %294 = vmatpush1.msra.mxu0 0.0
    %295 = vmatprep.subr.mxu0 0.0
    %296 = vmatpush1.msra.mxu0 0.0
    %297 = vmatprep.subr.mxu0 0.0
    %298 = vmatpush1.msra.mxu0 0.0
    %299 = vmatprep.subr.mxu0 0.0
    %300 = vmatpush1.msra.mxu0 0.0
    %301 = vmatprep.subr.mxu0 0.0
    %302 = vmatpush1.msra.mxu0 0.0
    %303 = vmatprep.subr.mxu0 0.0
    %304 = vmatpush1.msra.mxu0 0.0
    %305 = vmatprep.subr.mxu0 0.0
    %306 = vmatpush1.msra.mxu0 0.0
    %307 = vmatprep.subr.mxu0 0.0
    %308 = vmatpush1.msra.mxu0 0.0
    %309 = vmatprep.subr.mxu0 0.0
    %310 = vmatpush1.msra.mxu0 0.0
    %311 = vmatprep.subr.mxu0 0.0
    %312 = vmatpush1.msra.mxu0 0.0
    %313 = vmatprep.subr.mxu0 0.0
    %314 = vmatpush1.msra.mxu0 0.0
    %315 = vmatprep.subr.mxu0 0.0
    %316 = vmatpush1.msra.mxu0 0.0
    %317 = vmatprep.subr.mxu0 0.0
    %318 = vmatpush1.msra.mxu0 0.0
    %319 = vmatprep.subr.mxu0 0.0
    %320 = vmatpush1.msra.mxu0 0.0
    %321 = vmatprep.subr.mxu0 0.0
    %322 = vmatpush1.msra.mxu0 0.0
    %323 = vmatprep.subr.mxu0 0.0
    %324 = vmatpush1.msra.mxu0 0.0
    %325 = vmatprep.mubr.f32.mxu0 0.0
    %326 = vmatmul.mubr.f32.gmra.mrb[0].mxu0 %v259
    %v327 = vpop.f32.mrb[0].mxu0
    %v328 = vadd.f32 %v252, %v327
    %v329 = vpop.f32.mrb[0].mxu0
    %330 = vdwg.mxu0
    %vm331 = vcmp.gt.f32.partialorder %v328, 0.0
    %v332 = vmul.f32 %v328, 0.2
    %v333 = vsel %vm331, %v328, %v332
    %v334 = vld [vmem:[#allocation10] sm:$0xff]
    %v335 = vld [vmem:[#allocation10 + $0x8] sm:$0xff]
    %v336 = vld [vmem:[#allocation10 + $0x10] sm:$0xff]
    %v337 = vld [vmem:[#allocation10 + $0x18] sm:$0xff]
    %v338 = vld [vmem:[#allocation10 + $0x20] sm:$0xff]
    %v339 = vld [vmem:[#allocation10 + $0x28] sm:$0xff]
    %v340 = vld [vmem:[#allocation10 + $0x30] sm:$0xff]
    %v341 = vld [vmem:[#allocation10 + $0x38] sm:$0xff]
    %v342 = vld [vmem:[#allocation10 + $0x40] sm:$0xff]
    %v343 = vld [vmem:[#allocation10 + $0x48] sm:$0xff]
    %v344 = vld [vmem:[#allocation10 + $0x50] sm:$0xff]
    %v345 = vld [vmem:[#allocation10 + $0x58] sm:$0xff]
    %v346 = vld [vmem:[#allocation10 + $0x60] sm:$0xff]
    %v347 = vld [vmem:[#allocation10 + $0x68] sm:$0xff]
    %v348 = vld [vmem:[#allocation10 + $0x70] sm:$0xff]
    %v349 = vld [vmem:[#allocation10 + $0x78] sm:$0xff]
    %v350 = vpack.c.bf16 %v333, %v333
    %v351 = vld [vmem:[#allocation11] ss:$4 sm:$0x3]
    %v353 = vlaneseq
    %v354 = vshrl.u32 %v353, 7
    %v355 = vsub.s32 0, %v354
    %v356 = vrot.slane %v351, %v355
    %v357 = vlaneseq
    %v358 = vshrl.u32 %v357, 7
    %v359 = vsub.s32 1, %v358
    %v360 = vrot.slane %v351, %v359
    %v379 = vunpack.c.l.b16 %v334
    %v380 = vunpack.c.h.b16 %v334
    %v381 = vunpack.c.l.b16 %v335
    %v382 = vunpack.c.h.b16 %v335
    %v383 = vunpack.c.l.b16 %v336
    %v384 = vunpack.c.h.b16 %v336
    %v385 = vunpack.c.l.b16 %v337
    %v386 = vunpack.c.h.b16 %v337
    %v387 = vunpack.c.l.b16 %v338
    %v388 = vunpack.c.h.b16 %v338
    %v389 = vunpack.c.l.b16 %v339
    %v390 = vunpack.c.h.b16 %v339
    %v391 = vunpack.c.l.b16 %v340
    %v392 = vunpack.c.h.b16 %v340
    %v393 = vunpack.c.l.b16 %v341
    %v394 = vunpack.c.h.b16 %v341
    %v395 = vunpack.c.l.b16 %v342
    %v396 = vunpack.c.h.b16 %v342
    %v397 = vunpack.c.l.b16 %v343
    %v398 = vunpack.c.h.b16 %v343
    %v399 = vunpack.c.l.b16 %v344
    %v400 = vunpack.c.h.b16 %v344
    %v401 = vunpack.c.l.b16 %v345
    %v402 = vunpack.c.h.b16 %v345
    %v403 = vunpack.c.l.b16 %v346
    %v404 = vunpack.c.h.b16 %v346
    %v405 = vunpack.c.l.b16 %v347
    %v406 = vunpack.c.h.b16 %v347
    %v407 = vunpack.c.l.b16 %v348
    %v408 = vunpack.c.h.b16 %v348
    %v409 = vunpack.c.l.b16 %v349
    %v410 = vunpack.c.h.b16 %v349
    %v411 = vpack.c.b16 %v381, %v379
    %v412 = vpack.c.b16 %v382, %v380
    %v413 = vpack.c.b16 %v385, %v383
    %v414 = vpack.c.b16 %v386, %v384
    %v415 = vpack.c.b16 %v389, %v387
    %v416 = vpack.c.b16 %v390, %v388
    %v417 = vpack.c.b16 %v393, %v391
    %v418 = vpack.c.b16 %v394, %v392
    %v419 = vpack.c.b16 %v397, %v395
    %v420 = vpack.c.b16 %v398, %v396
    %v421 = vpack.c.b16 %v401, %v399
    %v422 = vpack.c.b16 %v402, %v400
    %v423 = vpack.c.b16 %v405, %v403
    %v424 = vpack.c.b16 %v406, %v404
    %v425 = vpack.c.b16 %v409, %v407
    %v426 = vpack.c.b16 %v410, %v408
    %443 = vmatprep.subr.bf16.mxu0 %v412
    %444 = vmatpush1.bf16.msra.mxu0 %v411
    %445 = vmatprep.subr.bf16.mxu0 %v414
    %446 = vmatpush1.bf16.msra.mxu0 %v413
    %447 = vmatprep.subr.bf16.mxu0 %v416
    %448 = vmatpush1.bf16.msra.mxu0 %v415
    %449 = vmatprep.subr.bf16.mxu0 %v418
    %450 = vmatpush1.bf16.msra.mxu0 %v417
    %451 = vmatprep.subr.bf16.mxu0 %v420
    %452 = vmatpush1.bf16.msra.mxu0 %v419
    %453 = vmatprep.subr.bf16.mxu0 %v422
    %454 = vmatpush1.bf16.msra.mxu0 %v421
    %455 = vmatprep.subr.bf16.mxu0 %v424
    %456 = vmatpush1.bf16.msra.mxu0 %v423
    %457 = vmatprep.subr.bf16.mxu0 %v426
    %458 = vmatpush1.bf16.msra.mxu0 %v425
    %459 = vmatprep.subr.bf16.mxu0 0
    %460 = vmatpush1.bf16.msra.mxu0 0
    %461 = vmatprep.subr.bf16.mxu0 0
    %462 = vmatpush1.bf16.msra.mxu0 0
    %463 = vmatprep.subr.bf16.mxu0 0
    %464 = vmatpush1.bf16.msra.mxu0 0
    %465 = vmatprep.subr.bf16.mxu0 0
    %466 = vmatpush1.bf16.msra.mxu0 0
    %467 = vmatprep.subr.bf16.mxu0 0
    %468 = vmatpush1.bf16.msra.mxu0 0
    %469 = vmatprep.subr.bf16.mxu0 0
    %470 = vmatpush1.bf16.msra.mxu0 0
    %471 = vmatprep.subr.bf16.mxu0 0
    %472 = vmatpush1.bf16.msra.mxu0 0
    %473 = vmatprep.subr.bf16.mxu0 0
    %474 = vmatpush1.bf16.msra.mxu0 0
    %475 = vmatprep.mubr.bf16.mxu0 0
    %476 = vmatmul.mubr.bf16.gmra.mrb[0].mxu0 %v350
    %v477 = vpop.f32.mrb[0].mxu0
    %v478 = vadd.f32 %v356, %v477
    %v479 = vpop.f32.mrb[0].mxu0
    %v480 = vadd.f32 %v360, %v479
    %v481 = vpop.f32.mrb[0].mxu0
    %v482 = vpop.f32.mrb[0].mxu0
    %483 = vdwg.mxu0
    %v484 = vrot.slane %v478, 4
    %v485 = vadd.f32 %v478, %v484
    %v486 = vrot.slane %v485, 2
    %v487 = vadd.f32 %v485, %v486
    %v488 = vrot.slane %v487, 1
    %v489 = vadd.f32 %v487, %v488
    %v490 = vrot.slane %v480, 4
    %v491 = vadd.f32 %v480, %v490
    %v492 = vrot.slane %v491, 2
    %v493 = vadd.f32 %v491, %v492
    %v494 = vrot.slane %v493, 1
    %v495 = vadd.f32 %v493, %v494
    %v496 = vrcp.pop 8.0
    %v497 = vmul.f32 %v489, %v496
    %v498 = vmul.f32 %v495, %v496
    %v499 = vsub.f32 %v478, %v497
    %v500 = vsub.f32 %v480, %v498
    %v501 = vmul.f32 %v499, %v499
    %v502 = vmul.f32 %v500, %v500
    %v503 = vrot.slane %v501, 4
    %v504 = vadd.f32 %v501, %v503
    %v505 = vrot.slane %v504, 2
    %v506 = vadd.f32 %v504, %v505
    %v507 = vrot.slane %v506, 1
    %v508 = vadd.f32 %v506, %v507
    %v509 = vrot.slane %v502, 4
    %v510 = vadd.f32 %v502, %v509
    %v511 = vrot.slane %v510, 2
    %v512 = vadd.f32 %v510, %v511
    %v513 = vrot.slane %v512, 1
    %v514 = vadd.f32 %v512, %v513
    %v515 = vmul.f32 %v508, %v496
    %v516 = vmul.f32 %v514, %v496
    %s517 = scalar_lea.vmem [#allocation11], 1
    %v518 = vld [vmem:[%s517] ss:$4 sm:$0x3]
    %v519 = vadd.f32 %v515, 0.8
    %v520 = vadd.f32 %v516, 0.8
    %v521 = vrsqrt.pop %v519
    %v522 = vrsqrt.pop %v520
    %v525 = vcombine.low %v521, %v522
    %v527 = vunpack.c.l.s4 1966171168
    %v528 = vunpack.c.0.s8 %v527
    %v529 = vlaneseq
    %v530 = vshrl.u32 %v529, 7
    %v531 = vsub.s32 %v528, %v530
    %v532 = vrot.slane %v525, %v531
    %v534 = vunpack.c.l.s4 1966171168
    %v535 = vunpack.c.0.s8 %v534
    %v536 = vlaneseq
    %v537 = vshrl.u32 %v536, 7
    %v538 = vsub.s32 %v535, %v537
    %v539 = vrot.slane %v532, %v538
    %v541 = vmul.f32 %v518, %v539
    %s542 = scalar_lea.vmem [#allocation11], 2
    %v543 = vld [vmem:[%s542] ss:$4 sm:$0x3]
    %v545 = vlaneseq
    %v546 = vshrl.u32 %v545, 7
    %v547 = vsub.s32 0, %v546
    %v548 = vrot.slane %v541, %v547
    %v549 = vlaneseq
    %v550 = vshrl.u32 %v549, 7
    %v551 = vsub.s32 1, %v550
    %v552 = vrot.slane %v541, %v551
    %v555 = vmul.f32 %v497, %v548
    %v556 = vmul.f32 %v498, %v552
    %v559 = vcombine.low %v555, %v556
    %v561 = vunpack.c.l.s4 1966171168
    %v562 = vunpack.c.0.s8 %v561
    %v563 = vlaneseq
    %v564 = vshrl.u32 %v563, 7
    %v565 = vsub.s32 %v562, %v564
    %v566 = vrot.slane %v559, %v565
    %v568 = vunpack.c.l.s4 1966171168
    %v569 = vunpack.c.0.s8 %v568
    %v570 = vlaneseq
    %v571 = vshrl.u32 %v570, 7
    %v572 = vsub.s32 %v569, %v571
    %v573 = vrot.slane %v566, %v572
    %v575 = vsub.f32 %v543, %v573
    %v576 = vmul.f32 %v478, %v548
    %v577 = vmul.f32 %v480, %v552
    %v579 = vlaneseq
    %v580 = vshrl.u32 %v579, 7
    %v581 = vsub.s32 0, %v580
    %v582 = vrot.slane %v575, %v581
    %v583 = vlaneseq
    %v584 = vshrl.u32 %v583, 7
    %v585 = vsub.s32 1, %v584
    %v586 = vrot.slane %v575, %v585
    %v589 = vadd.f32 %v576, %v582
    %v590 = vadd.f32 %v577, %v586
    %vm591 = vcmp.gt.f32.partialorder %v589, 0.0
    %vm592 = vcmp.gt.f32.partialorder %v590, 0.0
    %v593 = vmul.f32 %v589, 0.2
    %v594 = vmul.f32 %v590, 0.2
    %v595 = vsel %vm591, %v589, %v593
    %v596 = vsel %vm592, %v590, %v594
    %v597 = vld [vmem:[#allocation13] sm:$0xff]
    %v598 = vld [vmem:[#allocation13 + $0x8] sm:$0xff]
    %v599 = vld [vmem:[#allocation13 + $0x10] sm:$0xff]
    %v600 = vld [vmem:[#allocation13 + $0x18] sm:$0xff]
    %v601 = vld [vmem:[#allocation13 + $0x20] sm:$0xff]
    %v602 = vld [vmem:[#allocation13 + $0x28] sm:$0xff]
    %v603 = vld [vmem:[#allocation13 + $0x30] sm:$0xff]
    %v604 = vld [vmem:[#allocation13 + $0x38] sm:$0xff]
    %v605 = vld [vmem:[#allocation13 + $0x40] sm:$0xff]
    %v606 = vld [vmem:[#allocation13 + $0x48] sm:$0xff]
    %v607 = vld [vmem:[#allocation13 + $0x50] sm:$0xff]
    %v608 = vld [vmem:[#allocation13 + $0x58] sm:$0xff]
    %v609 = vld [vmem:[#allocation13 + $0x60] sm:$0xff]
    %v610 = vld [vmem:[#allocation13 + $0x68] sm:$0xff]
    %v611 = vld [vmem:[#allocation13 + $0x70] sm:$0xff]
    %v612 = vld [vmem:[#allocation13 + $0x78] sm:$0xff]
    %v613 = vld [vmem:[#allocation13 + $0x80] sm:$0xff]
    %v614 = vld [vmem:[#allocation13 + $0x88] sm:$0xff]
    %v615 = vld [vmem:[#allocation13 + $0x90] sm:$0xff]
    %v616 = vld [vmem:[#allocation13 + $0x98] sm:$0xff]
    %v617 = vld [vmem:[#allocation13 + $0xa0] sm:$0xff]
    %v618 = vld [vmem:[#allocation13 + $0xa8] sm:$0xff]
    %v619 = vld [vmem:[#allocation13 + $0xb0] sm:$0xff]
    %v620 = vld [vmem:[#allocation13 + $0xb8] sm:$0xff]
    %v621 = vld [vmem:[#allocation13 + $0xc0] sm:$0xff]
    %v622 = vld [vmem:[#allocation13 + $0xc8] sm:$0xff]
    %v623 = vld [vmem:[#allocation13 + $0xd0] sm:$0xff]
    %v624 = vld [vmem:[#allocation13 + $0xd8] sm:$0xff]
    %v625 = vld [vmem:[#allocation13 + $0xe0] sm:$0xff]
    %v626 = vld [vmem:[#allocation13 + $0xe8] sm:$0xff]
    %v627 = vld [vmem:[#allocation13 + $0xf0] sm:$0xff]
    %v628 = vld [vmem:[#allocation13 + $0xf8] sm:$0xff]
    %v629 = vld [vmem:[#allocation13 + $0x100] sm:$0xff]
    %v630 = vld [vmem:[#allocation13 + $0x108] sm:$0xff]
    %v631 = vld [vmem:[#allocation13 + $0x110] sm:$0xff]
    %v632 = vld [vmem:[#allocation13 + $0x118] sm:$0xff]
    %v633 = vld [vmem:[#allocation13 + $0x120] sm:$0xff]
    %v634 = vld [vmem:[#allocation13 + $0x128] sm:$0xff]
    %v635 = vld [vmem:[#allocation13 + $0x130] sm:$0xff]
    %v636 = vld [vmem:[#allocation13 + $0x138] sm:$0xff]
    %v637 = vld [vmem:[#allocation13 + $0x140] sm:$0xff]
    %v638 = vld [vmem:[#allocation13 + $0x148] sm:$0xff]
    %v639 = vld [vmem:[#allocation13 + $0x150] sm:$0xff]
    %v640 = vld [vmem:[#allocation13 + $0x158] sm:$0xff]
    %v641 = vld [vmem:[#allocation13 + $0x160] sm:$0xff]
    %v642 = vld [vmem:[#allocation13 + $0x168] sm:$0xff]
    %v643 = vld [vmem:[#allocation13 + $0x170] sm:$0xff]
    %v644 = vld [vmem:[#allocation13 + $0x178] sm:$0xff]
    %v645 = vld [vmem:[#allocation13 + $0x180] sm:$0xff]
    %v646 = vld [vmem:[#allocation13 + $0x188] sm:$0xff]
    %v647 = vld [vmem:[#allocation13 + $0x190] sm:$0xff]
    %v648 = vld [vmem:[#allocation13 + $0x198] sm:$0xff]
    %v649 = vld [vmem:[#allocation13 + $0x1a0] sm:$0xff]
    %v650 = vld [vmem:[#allocation13 + $0x1a8] sm:$0xff]
    %v651 = vld [vmem:[#allocation13 + $0x1b0] sm:$0xff]
    %v652 = vld [vmem:[#allocation13 + $0x1b8] sm:$0xff]
    %v653 = vld [vmem:[#allocation13 + $0x1c0] sm:$0xff]
    %v654 = vld [vmem:[#allocation13 + $0x1c8] sm:$0xff]
    %v655 = vld [vmem:[#allocation13 + $0x1d0] sm:$0xff]
    %v656 = vld [vmem:[#allocation13 + $0x1d8] sm:$0xff]
    %v657 = vld [vmem:[#allocation13 + $0x1e0] sm:$0xff]
    %v658 = vld [vmem:[#allocation13 + $0x1e8] sm:$0xff]
    %v659 = vld [vmem:[#allocation13 + $0x1f0] sm:$0xff]
    %v660 = vld [vmem:[#allocation13 + $0x1f8] sm:$0xff]
    %v661 = vpack.c.bf16 %v595, %v595
    %v662 = vpack.c.bf16 %v596, %v596
    %v663 = vld [vmem:[#allocation14] ss:$4 sm:$0xf]
    %v665 = vlaneseq
    %v666 = vshrl.u32 %v665, 7
    %v667 = vsub.s32 0, %v666
    %v668 = vrot.slane %v663, %v667
    %v669 = vlaneseq
    %v670 = vshrl.u32 %v669, 7
    %v671 = vsub.s32 1, %v670
    %v672 = vrot.slane %v663, %v671
    %v673 = vlaneseq
    %v674 = vshrl.u32 %v673, 7
    %v675 = vsub.s32 2, %v674
    %v676 = vrot.slane %v663, %v675
    %v677 = vlaneseq
    %v678 = vshrl.u32 %v677, 7
    %v679 = vsub.s32 3, %v678
    %v680 = vrot.slane %v663, %v679
    %v749 = vunpack.c.l.b16 %v597
    %v750 = vunpack.c.h.b16 %v597
    %v751 = vunpack.c.l.b16 %v598
    %v752 = vunpack.c.h.b16 %v598
    %v753 = vunpack.c.l.b16 %v599
    %v754 = vunpack.c.h.b16 %v599
    %v755 = vunpack.c.l.b16 %v600
    %v756 = vunpack.c.h.b16 %v600
    %v757 = vunpack.c.l.b16 %v601
    %v758 = vunpack.c.h.b16 %v601
    %v759 = vunpack.c.l.b16 %v602
    %v760 = vunpack.c.h.b16 %v602
    %v761 = vunpack.c.l.b16 %v603
    %v762 = vunpack.c.h.b16 %v603
    %v763 = vunpack.c.l.b16 %v604
    %v764 = vunpack.c.h.b16 %v604
    %v765 = vunpack.c.l.b16 %v605
    %v766 = vunpack.c.h.b16 %v605
    %v767 = vunpack.c.l.b16 %v606
    %v768 = vunpack.c.h.b16 %v606
    %v769 = vunpack.c.l.b16 %v607
    %v770 = vunpack.c.h.b16 %v607
    %v771 = vunpack.c.l.b16 %v608
    %v772 = vunpack.c.h.b16 %v608
    %v773 = vunpack.c.l.b16 %v609
    %v774 = vunpack.c.h.b16 %v609
    %v775 = vunpack.c.l.b16 %v610
    %v776 = vunpack.c.h.b16 %v610
    %v777 = vunpack.c.l.b16 %v611
    %v778 = vunpack.c.h.b16 %v611
    %v779 = vunpack.c.l.b16 %v612
    %v780 = vunpack.c.h.b16 %v612
    %v781 = vunpack.c.l.b16 %v613
    %v782 = vunpack.c.h.b16 %v613
    %v783 = vunpack.c.l.b16 %v614
    %v784 = vunpack.c.h.b16 %v614
    %v785 = vunpack.c.l.b16 %v615
    %v786 = vunpack.c.h.b16 %v615
    %v787 = vunpack.c.l.b16 %v616
    %v788 = vunpack.c.h.b16 %v616
    %v789 = vunpack.c.l.b16 %v617
    %v790 = vunpack.c.h.b16 %v617
    %v791 = vunpack.c.l.b16 %v618
    %v792 = vunpack.c.h.b16 %v618
    %v793 = vunpack.c.l.b16 %v619
    %v794 = vunpack.c.h.b16 %v619
    %v795 = vunpack.c.l.b16 %v620
    %v796 = vunpack.c.h.b16 %v620
    %v797 = vunpack.c.l.b16 %v621
    %v798 = vunpack.c.h.b16 %v621
    %v799 = vunpack.c.l.b16 %v622
    %v800 = vunpack.c.h.b16 %v622
    %v801 = vunpack.c.l.b16 %v623
    %v802 = vunpack.c.h.b16 %v623
    %v803 = vunpack.c.l.b16 %v624
    %v804 = vunpack.c.h.b16 %v624
    %v805 = vunpack.c.l.b16 %v625
    %v806 = vunpack.c.h.b16 %v625
    %v807 = vunpack.c.l.b16 %v626
    %v808 = vunpack.c.h.b16 %v626
    %v809 = vunpack.c.l.b16 %v627
    %v810 = vunpack.c.h.b16 %v627
    %v811 = vunpack.c.l.b16 %v628
    %v812 = vunpack.c.h.b16 %v628
    %v813 = vunpack.c.l.b16 %v629
    %v814 = vunpack.c.h.b16 %v629
    %v815 = vunpack.c.l.b16 %v630
    %v816 = vunpack.c.h.b16 %v630
    %v817 = vunpack.c.l.b16 %v631
    %v818 = vunpack.c.h.b16 %v631
    %v819 = vunpack.c.l.b16 %v632
    %v820 = vunpack.c.h.b16 %v632
    %v821 = vunpack.c.l.b16 %v633
    %v822 = vunpack.c.h.b16 %v633
    %v823 = vunpack.c.l.b16 %v634
    %v824 = vunpack.c.h.b16 %v634
    %v825 = vunpack.c.l.b16 %v635
    %v826 = vunpack.c.h.b16 %v635
    %v827 = vunpack.c.l.b16 %v636
    %v828 = vunpack.c.h.b16 %v636
    %v829 = vunpack.c.l.b16 %v637
    %v830 = vunpack.c.h.b16 %v637
    %v831 = vunpack.c.l.b16 %v638
    %v832 = vunpack.c.h.b16 %v638
    %v833 = vunpack.c.l.b16 %v639
    %v834 = vunpack.c.h.b16 %v639
    %v835 = vunpack.c.l.b16 %v640
    %v836 = vunpack.c.h.b16 %v640
    %v837 = vunpack.c.l.b16 %v641
    %v838 = vunpack.c.h.b16 %v641
    %v839 = vunpack.c.l.b16 %v642
    %v840 = vunpack.c.h.b16 %v642
    %v841 = vunpack.c.l.b16 %v643
    %v842 = vunpack.c.h.b16 %v643
    %v843 = vunpack.c.l.b16 %v644
    %v844 = vunpack.c.h.b16 %v644
    %v845 = vunpack.c.l.b16 %v645
    %v846 = vunpack.c.h.b16 %v645
    %v847 = vunpack.c.l.b16 %v646
    %v848 = vunpack.c.h.b16 %v646
    %v849 = vunpack.c.l.b16 %v647
    %v850 = vunpack.c.h.b16 %v647
    %v851 = vunpack.c.l.b16 %v648
    %v852 = vunpack.c.h.b16 %v648
    %v853 = vunpack.c.l.b16 %v649
    %v854 = vunpack.c.h.b16 %v649
    %v855 = vunpack.c.l.b16 %v650
    %v856 = vunpack.c.h.b16 %v650
    %v857 = vunpack.c.l.b16 %v651
    %v858 = vunpack.c.h.b16 %v651
    %v859 = vunpack.c.l.b16 %v652
    %v860 = vunpack.c.h.b16 %v652
    %v861 = vunpack.c.l.b16 %v653
    %v862 = vunpack.c.h.b16 %v653
    %v863 = vunpack.c.l.b16 %v654
    %v864 = vunpack.c.h.b16 %v654
    %v865 = vunpack.c.l.b16 %v655
    %v866 = vunpack.c.h.b16 %v655
    %v867 = vunpack.c.l.b16 %v656
    %v868 = vunpack.c.h.b16 %v656
    %v869 = vunpack.c.l.b16 %v657
    %v870 = vunpack.c.h.b16 %v657
    %v871 = vunpack.c.l.b16 %v658
    %v872 = vunpack.c.h.b16 %v658
    %v873 = vunpack.c.l.b16 %v659
    %v874 = vunpack.c.h.b16 %v659
    %v875 = vunpack.c.l.b16 %v660
    %v876 = vunpack.c.h.b16 %v660
    %v877 = vpack.c.b16 %v753, %v749
    %v878 = vpack.c.b16 %v754, %v750
    %v879 = vpack.c.b16 %v755, %v751
    %v880 = vpack.c.b16 %v756, %v752
    %v881 = vpack.c.b16 %v761, %v757
    %v882 = vpack.c.b16 %v762, %v758
    %v883 = vpack.c.b16 %v763, %v759
    %v884 = vpack.c.b16 %v764, %v760
    %v885 = vpack.c.b16 %v769, %v765
    %v886 = vpack.c.b16 %v770, %v766
    %v887 = vpack.c.b16 %v771, %v767
    %v888 = vpack.c.b16 %v772, %v768
    %v889 = vpack.c.b16 %v777, %v773
    %v890 = vpack.c.b16 %v778, %v774
    %v891 = vpack.c.b16 %v779, %v775
    %v892 = vpack.c.b16 %v780, %v776
    %v893 = vpack.c.b16 %v785, %v781
    %v894 = vpack.c.b16 %v786, %v782
    %v895 = vpack.c.b16 %v787, %v783
    %v896 = vpack.c.b16 %v788, %v784
    %v897 = vpack.c.b16 %v793, %v789
    %v898 = vpack.c.b16 %v794, %v790
    %v899 = vpack.c.b16 %v795, %v791
    %v900 = vpack.c.b16 %v796, %v792
    %v901 = vpack.c.b16 %v801, %v797
    %v902 = vpack.c.b16 %v802, %v798
    %v903 = vpack.c.b16 %v803, %v799
    %v904 = vpack.c.b16 %v804, %v800
    %v905 = vpack.c.b16 %v809, %v805
    %v906 = vpack.c.b16 %v810, %v806
    %v907 = vpack.c.b16 %v811, %v807
    %v908 = vpack.c.b16 %v812, %v808
    %v909 = vpack.c.b16 %v817, %v813
    %v910 = vpack.c.b16 %v818, %v814
    %v911 = vpack.c.b16 %v819, %v815
    %v912 = vpack.c.b16 %v820, %v816
    %v913 = vpack.c.b16 %v825, %v821
    %v914 = vpack.c.b16 %v826, %v822
    %v915 = vpack.c.b16 %v827, %v823
    %v916 = vpack.c.b16 %v828, %v824
    %v917 = vpack.c.b16 %v833, %v829
    %v918 = vpack.c.b16 %v834, %v830
    %v919 = vpack.c.b16 %v835, %v831
    %v920 = vpack.c.b16 %v836, %v832
    %v921 = vpack.c.b16 %v841, %v837
    %v922 = vpack.c.b16 %v842, %v838
    %v923 = vpack.c.b16 %v843, %v839
    %v924 = vpack.c.b16 %v844, %v840
    %v925 = vpack.c.b16 %v849, %v845
    %v926 = vpack.c.b16 %v850, %v846
    %v927 = vpack.c.b16 %v851, %v847
    %v928 = vpack.c.b16 %v852, %v848
    %v929 = vpack.c.b16 %v857, %v853
    %v930 = vpack.c.b16 %v858, %v854
    %v931 = vpack.c.b16 %v859, %v855
    %v932 = vpack.c.b16 %v860, %v856
    %v933 = vpack.c.b16 %v865, %v861
    %v934 = vpack.c.b16 %v866, %v862
    %v935 = vpack.c.b16 %v867, %v863
    %v936 = vpack.c.b16 %v868, %v864
    %v937 = vpack.c.b16 %v873, %v869
    %v938 = vpack.c.b16 %v874, %v870
    %v939 = vpack.c.b16 %v875, %v871
    %v940 = vpack.c.b16 %v876, %v872
    %1005 = vmatprep.subr.bf16.mxu0 %v878
    %1006 = vmatpush1.bf16.msra.mxu0 %v877
    %1007 = vmatprep.subr.bf16.mxu0 %v882
    %1008 = vmatpush1.bf16.msra.mxu0 %v881
    %1009 = vmatprep.subr.bf16.mxu0 %v886
    %1010 = vmatpush1.bf16.msra.mxu0 %v885
    %1011 = vmatprep.subr.bf16.mxu0 %v890
    %1012 = vmatpush1.bf16.msra.mxu0 %v889
    %1013 = vmatprep.subr.bf16.mxu0 %v894
    %1014 = vmatpush1.bf16.msra.mxu0 %v893
    %1015 = vmatprep.subr.bf16.mxu0 %v898
    %1016 = vmatpush1.bf16.msra.mxu0 %v897
    %1017 = vmatprep.subr.bf16.mxu0 %v902
    %1018 = vmatpush1.bf16.msra.mxu0 %v901
    %1019 = vmatprep.subr.bf16.mxu0 %v906
    %1020 = vmatpush1.bf16.msra.mxu0 %v905
    %1021 = vmatprep.subr.bf16.mxu0 %v910
    %1022 = vmatpush1.bf16.msra.mxu0 %v909
    %1023 = vmatprep.subr.bf16.mxu0 %v914
    %1024 = vmatpush1.bf16.msra.mxu0 %v913
    %1025 = vmatprep.subr.bf16.mxu0 %v918
    %1026 = vmatpush1.bf16.msra.mxu0 %v917
    %1027 = vmatprep.subr.bf16.mxu0 %v922
    %1028 = vmatpush1.bf16.msra.mxu0 %v921
    %1029 = vmatprep.subr.bf16.mxu0 %v926
    %1030 = vmatpush1.bf16.msra.mxu0 %v925
    %1031 = vmatprep.subr.bf16.mxu0 %v930
    %1032 = vmatpush1.bf16.msra.mxu0 %v929
    %1033 = vmatprep.subr.bf16.mxu0 %v934
    %1034 = vmatpush1.bf16.msra.mxu0 %v933
    %1035 = vmatprep.subr.bf16.mxu0 %v938
    %1036 = vmatpush1.bf16.msra.mxu0 %v937
    %1037 = vmatprep.mubr.bf16.mxu0 %v662
    %1038 = vmatmul.mubr.bf16.gmra.mrb[0].mxu0 %v661
    %v1039 = vpop.f32.mrb[0].mxu0
    %v1040 = vadd.f32 %v668, %v1039
    %v1041 = vpop.f32.mrb[0].mxu0
    %v1042 = vadd.f32 %v672, %v1041
    %v1043 = vpop.f32.mrb[0].mxu0
    %v1044 = vpop.f32.mrb[0].mxu0
    %1045 = vdwg.mxu0
    %1046 = vmatprep.subr.bf16.mxu0 %v880
    %1047 = vmatpush1.bf16.msra.mxu0 %v879
    %1048 = vmatprep.subr.bf16.mxu0 %v884
    %1049 = vmatpush1.bf16.msra.mxu0 %v883
    %1050 = vmatprep.subr.bf16.mxu0 %v888
    %1051 = vmatpush1.bf16.msra.mxu0 %v887
    %1052 = vmatprep.subr.bf16.mxu0 %v892
    %1053 = vmatpush1.bf16.msra.mxu0 %v891
    %1054 = vmatprep.subr.bf16.mxu0 %v896
    %1055 = vmatpush1.bf16.msra.mxu0 %v895
    %1056 = vmatprep.subr.bf16.mxu0 %v900
    %1057 = vmatpush1.bf16.msra.mxu0 %v899
    %1058 = vmatprep.subr.bf16.mxu0 %v904
    %1059 = vmatpush1.bf16.msra.mxu0 %v903
    %1060 = vmatprep.subr.bf16.mxu0 %v908
    %1061 = vmatpush1.bf16.msra.mxu0 %v907
    %1062 = vmatprep.subr.bf16.mxu0 %v912
    %1063 = vmatpush1.bf16.msra.mxu0 %v911
    %1064 = vmatprep.subr.bf16.mxu0 %v916
    %1065 = vmatpush1.bf16.msra.mxu0 %v915
    %1066 = vmatprep.subr.bf16.mxu0 %v920
    %1067 = vmatpush1.bf16.msra.mxu0 %v919
    %1068 = vmatprep.subr.bf16.mxu0 %v924
    %1069 = vmatpush1.bf16.msra.mxu0 %v923
    %1070 = vmatprep.subr.bf16.mxu0 %v928
    %1071 = vmatpush1.bf16.msra.mxu0 %v927
    %1072 = vmatprep.subr.bf16.mxu0 %v932
    %1073 = vmatpush1.bf16.msra.mxu0 %v931
    %1074 = vmatprep.subr.bf16.mxu0 %v936
    %1075 = vmatpush1.bf16.msra.mxu0 %v935
    %1076 = vmatprep.subr.bf16.mxu0 %v940
    %1077 = vmatpush1.bf16.msra.mxu0 %v939
    %1078 = vmatprep.mubr.bf16.mxu0 %v662
    %1079 = vmatmul.mubr.bf16.gmra.mrb[0].mxu0 %v661
    %v1080 = vpop.f32.mrb[0].mxu0
    %v1081 = vadd.f32 %v676, %v1080
    %v1082 = vpop.f32.mrb[0].mxu0
    %v1083 = vadd.f32 %v680, %v1082
    %v1084 = vpop.f32.mrb[0].mxu0
    %v1085 = vpop.f32.mrb[0].mxu0
    %1086 = vdwg.mxu0
    %v1087 = vrot.slane %v1040, 4
    %v1088 = vadd.f32 %v1040, %v1087
    %v1089 = vrot.slane %v1088, 2
    %v1090 = vadd.f32 %v1088, %v1089
    %v1091 = vrot.slane %v1090, 1
    %v1092 = vadd.f32 %v1090, %v1091
    %v1093 = vrot.slane %v1042, 4
    %v1094 = vadd.f32 %v1042, %v1093
    %v1095 = vrot.slane %v1094, 2
    %v1096 = vadd.f32 %v1094, %v1095
    %v1097 = vrot.slane %v1096, 1
    %v1098 = vadd.f32 %v1096, %v1097
    %v1099 = vrot.slane %v1081, 4
    %v1100 = vadd.f32 %v1081, %v1099
    %v1101 = vrot.slane %v1100, 2
    %v1102 = vadd.f32 %v1100, %v1101
    %v1103 = vrot.slane %v1102, 1
    %v1104 = vadd.f32 %v1102, %v1103
    %v1105 = vrot.slane %v1083, 4
    %v1106 = vadd.f32 %v1083, %v1105
    %v1107 = vrot.slane %v1106, 2
    %v1108 = vadd.f32 %v1106, %v1107
    %v1109 = vrot.slane %v1108, 1
    %v1110 = vadd.f32 %v1108, %v1109
    %v1111 = vmul.f32 %v1092, %v496
    %v1112 = vmul.f32 %v1098, %v496
    %v1113 = vmul.f32 %v1104, %v496
    %v1114 = vmul.f32 %v1110, %v496
    %v1115 = vsub.f32 %v1040, %v1111
    %v1116 = vsub.f32 %v1042, %v1112
    %v1117 = vsub.f32 %v1081, %v1113
    %v1118 = vsub.f32 %v1083, %v1114
    %v1119 = vmul.f32 %v1115, %v1115
    %v1120 = vmul.f32 %v1116, %v1116
    %v1121 = vmul.f32 %v1117, %v1117
    %v1122 = vmul.f32 %v1118, %v1118
    %v1123 = vrot.slane %v1119, 4
    %v1124 = vadd.f32 %v1119, %v1123
    %v1125 = vrot.slane %v1124, 2
    %v1126 = vadd.f32 %v1124, %v1125
    %v1127 = vrot.slane %v1126, 1
    %v1128 = vadd.f32 %v1126, %v1127
    %v1129 = vrot.slane %v1120, 4
    %v1130 = vadd.f32 %v1120, %v1129
    %v1131 = vrot.slane %v1130, 2
    %v1132 = vadd.f32 %v1130, %v1131
    %v1133 = vrot.slane %v1132, 1
    %v1134 = vadd.f32 %v1132, %v1133
    %v1135 = vrot.slane %v1121, 4
    %v1136 = vadd.f32 %v1121, %v1135
    %v1137 = vrot.slane %v1136, 2
    %v1138 = vadd.f32 %v1136, %v1137
    %v1139 = vrot.slane %v1138, 1
    %v1140 = vadd.f32 %v1138, %v1139
    %v1141 = vrot.slane %v1122, 4
    %v1142 = vadd.f32 %v1122, %v1141
    %v1143 = vrot.slane %v1142, 2
    %v1144 = vadd.f32 %v1142, %v1143
    %v1145 = vrot.slane %v1144, 1
    %v1146 = vadd.f32 %v1144, %v1145
    %v1147 = vmul.f32 %v1128, %v496
    %v1148 = vmul.f32 %v1134, %v496
    %v1149 = vmul.f32 %v1140, %v496
    %v1150 = vmul.f32 %v1146, %v496
    %s1151 = scalar_lea.vmem [#allocation14], 1
    %v1152 = vld [vmem:[%s1151] ss:$4 sm:$0xf]
    %v1153 = vadd.f32 %v1147, 0.8
    %v1154 = vadd.f32 %v1148, 0.8
    %v1155 = vadd.f32 %v1149, 0.8
    %v1156 = vadd.f32 %v1150, 0.8
    %v1157 = vrsqrt.pop %v1153
    %v1158 = vrsqrt.pop %v1154
    %v1159 = vrsqrt.pop %v1155
    %v1160 = vrsqrt.pop %v1156
    %v1165 = vcombine.low %v1157, %v1158
    %v1166 = vcombine.low %v1159, %v1160
    %v1168 = vunpack.c.l.s4 1966171168
    %v1169 = vunpack.c.0.s8 %v1168
    %v1170 = vlaneseq
    %v1171 = vshrl.u32 %v1170, 7
    %v1172 = vsub.s32 %v1169, %v1171
    %v1173 = vrot.slane %v1165, %v1172
    %v1175 = vunpack.c.l.s4 1966171168
    %v1176 = vunpack.c.0.s8 %v1175
    %v1177 = vlaneseq
    %v1178 = vshrl.u32 %v1177, 7
    %v1179 = vsub.s32 %v1176, %v1178
    %v1180 = vrot.slane %v1166, %v1179
    %v1181 = vcombine.low %v1173, %v1180
    %v1183 = vunpack.c.l.s4 1966171168
    %v1184 = vunpack.c.0.s8 %v1183
    %v1185 = vlaneseq
    %v1186 = vshrl.u32 %v1185, 7
    %v1187 = vsub.s32 %v1184, %v1186
    %v1188 = vrot.slane %v1181, %v1187
    %v1190 = vmul.f32 %v1152, %v1188
    %s1191 = scalar_lea.vmem [#allocation14], 2
    %v1192 = vld [vmem:[%s1191] ss:$4 sm:$0xf]
    %v1194 = vlaneseq
    %v1195 = vshrl.u32 %v1194, 7
    %v1196 = vsub.s32 0, %v1195
    %v1197 = vrot.slane %v1190, %v1196
    %v1198 = vlaneseq
    %v1199 = vshrl.u32 %v1198, 7
    %v1200 = vsub.s32 1, %v1199
    %v1201 = vrot.slane %v1190, %v1200
    %v1202 = vlaneseq
    %v1203 = vshrl.u32 %v1202, 7
    %v1204 = vsub.s32 2, %v1203
    %v1205 = vrot.slane %v1190, %v1204
    %v1206 = vlaneseq
    %v1207 = vshrl.u32 %v1206, 7
    %v1208 = vsub.s32 3, %v1207
    %v1209 = vrot.slane %v1190, %v1208
    %v1214 = vmul.f32 %v1111, %v1197
    %v1215 = vmul.f32 %v1112, %v1201
    %v1216 = vmul.f32 %v1113, %v1205
    %v1217 = vmul.f32 %v1114, %v1209
    %v1222 = vcombine.low %v1214, %v1215
    %v1223 = vcombine.low %v1216, %v1217
    %v1225 = vunpack.c.l.s4 1966171168
    %v1226 = vunpack.c.0.s8 %v1225
    %v1227 = vlaneseq
    %v1228 = vshrl.u32 %v1227, 7
    %v1229 = vsub.s32 %v1226, %v1228
    %v1230 = vrot.slane %v1222, %v1229
    %v1232 = vunpack.c.l.s4 1966171168
    %v1233 = vunpack.c.0.s8 %v1232
    %v1234 = vlaneseq
    %v1235 = vshrl.u32 %v1234, 7
    %v1236 = vsub.s32 %v1233, %v1235
    %v1237 = vrot.slane %v1223, %v1236
    %v1238 = vcombine.low %v1230, %v1237
    %v1240 = vunpack.c.l.s4 1966171168
    %v1241 = vunpack.c.0.s8 %v1240
    %v1242 = vlaneseq
    %v1243 = vshrl.u32 %v1242, 7
    %v1244 = vsub.s32 %v1241, %v1243
    %v1245 = vrot.slane %v1238, %v1244
    %v1247 = vsub.f32 %v1192, %v1245
    %v1248 = vmul.f32 %v1040, %v1197
    %v1249 = vmul.f32 %v1042, %v1201
    %v1250 = vmul.f32 %v1081, %v1205
    %v1251 = vmul.f32 %v1083, %v1209
    %v1253 = vlaneseq
    %v1254 = vshrl.u32 %v1253, 7
    %v1255 = vsub.s32 0, %v1254
    %v1256 = vrot.slane %v1247, %v1255
    %v1257 = vlaneseq
    %v1258 = vshrl.u32 %v1257, 7
    %v1259 = vsub.s32 1, %v1258
    %v1260 = vrot.slane %v1247, %v1259
    %v1261 = vlaneseq
    %v1262 = vshrl.u32 %v1261, 7
    %v1263 = vsub.s32 2, %v1262
    %v1264 = vrot.slane %v1247, %v1263
    %v1265 = vlaneseq
    %v1266 = vshrl.u32 %v1265, 7
    %v1267 = vsub.s32 3, %v1266
    %v1268 = vrot.slane %v1247, %v1267
    %v1273 = vadd.f32 %v1248, %v1256
    %v1274 = vadd.f32 %v1249, %v1260
    %v1275 = vadd.f32 %v1250, %v1264
    %v1276 = vadd.f32 %v1251, %v1268
    %vm1277 = vcmp.gt.f32.partialorder %v1273, 0.0
    %vm1278 = vcmp.gt.f32.partialorder %v1274, 0.0
    %vm1279 = vcmp.gt.f32.partialorder %v1275, 0.0
    %vm1280 = vcmp.gt.f32.partialorder %v1276, 0.0
    %v1281 = vmul.f32 %v1273, 0.2
    %v1282 = vmul.f32 %v1274, 0.2
    %v1283 = vmul.f32 %v1275, 0.2
    %v1284 = vmul.f32 %v1276, 0.2
    %v1285 = vsel %vm1277, %v1273, %v1281
    %v1286 = vsel %vm1278, %v1274, %v1282
    %v1287 = vsel %vm1279, %v1275, %v1283
    %v1288 = vsel %vm1280, %v1276, %v1284
    %s1289 = smul.u32 4, 64
    %s1290 = smul.u32 %s1289, 8
    %s1291 = sshll.u32 %s1290, 4
    %1292 = dma.done [#allocation4], %s1291
    %v1293 = vld [vmem:[#allocation2] sm:$0xff]
    %v1294 = vld [vmem:[#allocation2 + $0x8] sm:$0xff]
    %v1295 = vld [vmem:[#allocation2 + $0x10] sm:$0xff]
    %v1296 = vld [vmem:[#allocation2 + $0x18] sm:$0xff]
    %v1297 = vld [vmem:[#allocation2 + $0x20] sm:$0xff]
    %v1298 = vld [vmem:[#allocation2 + $0x28] sm:$0xff]
    %v1299 = vld [vmem:[#allocation2 + $0x30] sm:$0xff]
    %v1300 = vld [vmem:[#allocation2 + $0x38] sm:$0xff]
    %v1301 = vld [vmem:[#allocation2 + $0x40] sm:$0xff]
    %v1302 = vld [vmem:[#allocation2 + $0x48] sm:$0xff]
    %v1303 = vld [vmem:[#allocation2 + $0x50] sm:$0xff]
    %v1304 = vld [vmem:[#allocation2 + $0x58] sm:$0xff]
    %v1305 = vld [vmem:[#allocation2 + $0x60] sm:$0xff]
    %v1306 = vld [vmem:[#allocation2 + $0x68] sm:$0xff]
    %v1307 = vld [vmem:[#allocation2 + $0x70] sm:$0xff]
    %v1308 = vld [vmem:[#allocation2 + $0x78] sm:$0xff]
    %v1309 = vld [vmem:[#allocation2 + $0x80] sm:$0xff]
    %v1310 = vld [vmem:[#allocation2 + $0x88] sm:$0xff]
    %v1311 = vld [vmem:[#allocation2 + $0x90] sm:$0xff]
    %v1312 = vld [vmem:[#allocation2 + $0x98] sm:$0xff]
    %v1313 = vld [vmem:[#allocation2 + $0xa0] sm:$0xff]
    %v1314 = vld [vmem:[#allocation2 + $0xa8] sm:$0xff]
    %v1315 = vld [vmem:[#allocation2 + $0xb0] sm:$0xff]
    %v1316 = vld [vmem:[#allocation2 + $0xb8] sm:$0xff]
    %v1317 = vld [vmem:[#allocation2 + $0xc0] sm:$0xff]
    %v1318 = vld [vmem:[#allocation2 + $0xc8] sm:$0xff]
    %v1319 = vld [vmem:[#allocation2 + $0xd0] sm:$0xff]
    %v1320 = vld [vmem:[#allocation2 + $0xd8] sm:$0xff]
    %v1321 = vld [vmem:[#allocation2 + $0xe0] sm:$0xff]
    %v1322 = vld [vmem:[#allocation2 + $0xe8] sm:$0xff]
    %v1323 = vld [vmem:[#allocation2 + $0xf0] sm:$0xff]
    %v1324 = vld [vmem:[#allocation2 + $0xf8] sm:$0xff]
    %v1325 = vld [vmem:[#allocation2 + $0x100] sm:$0xff]
    %v1326 = vld [vmem:[#allocation2 + $0x108] sm:$0xff]
    %v1327 = vld [vmem:[#allocation2 + $0x110] sm:$0xff]
    %v1328 = vld [vmem:[#allocation2 + $0x118] sm:$0xff]
    %v1329 = vld [vmem:[#allocation2 + $0x120] sm:$0xff]
    %v1330 = vld [vmem:[#allocation2 + $0x128] sm:$0xff]
    %v1331 = vld [vmem:[#allocation2 + $0x130] sm:$0xff]
    %v1332 = vld [vmem:[#allocation2 + $0x138] sm:$0xff]
    %v1333 = vld [vmem:[#allocation2 + $0x140] sm:$0xff]
    %v1334 = vld [vmem:[#allocation2 + $0x148] sm:$0xff]
    %v1335 = vld [vmem:[#allocation2 + $0x150] sm:$0xff]
    %v1336 = vld [vmem:[#allocation2 + $0x158] sm:$0xff]
    %v1337 = vld [vmem:[#allocation2 + $0x160] sm:$0xff]
    %v1338 = vld [vmem:[#allocation2 + $0x168] sm:$0xff]
    %v1339 = vld [vmem:[#allocation2 + $0x170] sm:$0xff]
    %v1340 = vld [vmem:[#allocation2 + $0x178] sm:$0xff]
    %v1341 = vld [vmem:[#allocation2 + $0x180] sm:$0xff]
    %v1342 = vld [vmem:[#allocation2 + $0x188] sm:$0xff]
    %v1343 = vld [vmem:[#allocation2 + $0x190] sm:$0xff]
    %v1344 = vld [vmem:[#allocation2 + $0x198] sm:$0xff]
    %v1345 = vld [vmem:[#allocation2 + $0x1a0] sm:$0xff]
    %v1346 = vld [vmem:[#allocation2 + $0x1a8] sm:$0xff]
    %v1347 = vld [vmem:[#allocation2 + $0x1b0] sm:$0xff]
    %v1348 = vld [vmem:[#allocation2 + $0x1b8] sm:$0xff]
    %v1349 = vld [vmem:[#allocation2 + $0x1c0] sm:$0xff]
    %v1350 = vld [vmem:[#allocation2 + $0x1c8] sm:$0xff]
    %v1351 = vld [vmem:[#allocation2 + $0x1d0] sm:$0xff]
    %v1352 = vld [vmem:[#allocation2 + $0x1d8] sm:$0xff]
    %v1353 = vld [vmem:[#allocation2 + $0x1e0] sm:$0xff]
    %v1354 = vld [vmem:[#allocation2 + $0x1e8] sm:$0xff]
    %v1355 = vld [vmem:[#allocation2 + $0x1f0] sm:$0xff]
    %v1356 = vld [vmem:[#allocation2 + $0x1f8] sm:$0xff]
    %v1357 = vld [vmem:[#allocation2 + $0x200] sm:$0xff]
    %v1358 = vld [vmem:[#allocation2 + $0x208] sm:$0xff]
    %v1359 = vld [vmem:[#allocation2 + $0x210] sm:$0xff]
    %v1360 = vld [vmem:[#allocation2 + $0x218] sm:$0xff]
    %v1361 = vld [vmem:[#allocation2 + $0x220] sm:$0xff]
    %v1362 = vld [vmem:[#allocation2 + $0x228] sm:$0xff]
    %v1363 = vld [vmem:[#allocation2 + $0x230] sm:$0xff]
    %v1364 = vld [vmem:[#allocation2 + $0x238] sm:$0xff]
    %v1365 = vld [vmem:[#allocation2 + $0x240] sm:$0xff]
    %v1366 = vld [vmem:[#allocation2 + $0x248] sm:$0xff]
    %v1367 = vld [vmem:[#allocation2 + $0x250] sm:$0xff]
    %v1368 = vld [vmem:[#allocation2 + $0x258] sm:$0xff]
    %v1369 = vld [vmem:[#allocation2 + $0x260] sm:$0xff]
    %v1370 = vld [vmem:[#allocation2 + $0x268] sm:$0xff]
    %v1371 = vld [vmem:[#allocation2 + $0x270] sm:$0xff]
    %v1372 = vld [vmem:[#allocation2 + $0x278] sm:$0xff]
    %v1373 = vld [vmem:[#allocation2 + $0x280] sm:$0xff]
    %v1374 = vld [vmem:[#allocation2 + $0x288] sm:$0xff]
    %v1375 = vld [vmem:[#allocation2 + $0x290] sm:$0xff]
    %v1376 = vld [vmem:[#allocation2 + $0x298] sm:$0xff]
    %v1377 = vld [vmem:[#allocation2 + $0x2a0] sm:$0xff]
    %v1378 = vld [vmem:[#allocation2 + $0x2a8] sm:$0xff]
    %v1379 = vld [vmem:[#allocation2 + $0x2b0] sm:$0xff]
    %v1380 = vld [vmem:[#allocation2 + $0x2b8] sm:$0xff]
    %v1381 = vld [vmem:[#allocation2 + $0x2c0] sm:$0xff]
    %v1382 = vld [vmem:[#allocation2 + $0x2c8] sm:$0xff]
    %v1383 = vld [vmem:[#allocation2 + $0x2d0] sm:$0xff]
    %v1384 = vld [vmem:[#allocation2 + $0x2d8] sm:$0xff]
    %v1385 = vld [vmem:[#allocation2 + $0x2e0] sm:$0xff]
    %v1386 = vld [vmem:[#allocation2 + $0x2e8] sm:$0xff]
    %v1387 = vld [vmem:[#allocation2 + $0x2f0] sm:$0xff]
    %v1388 = vld [vmem:[#allocation2 + $0x2f8] sm:$0xff]
    %v1389 = vld [vmem:[#allocation2 + $0x300] sm:$0xff]
    %v1390 = vld [vmem:[#allocation2 + $0x308] sm:$0xff]
    %v1391 = vld [vmem:[#allocation2 + $0x310] sm:$0xff]
    %v1392 = vld [vmem:[#allocation2 + $0x318] sm:$0xff]
    %v1393 = vld [vmem:[#allocation2 + $0x320] sm:$0xff]
    %v1394 = vld [vmem:[#allocation2 + $0x328] sm:$0xff]
    %v1395 = vld [vmem:[#allocation2 + $0x330] sm:$0xff]
    %v1396 = vld [vmem:[#allocation2 + $0x338] sm:$0xff]
    %v1397 = vld [vmem:[#allocation2 + $0x340] sm:$0xff]
    %v1398 = vld [vmem:[#allocation2 + $0x348] sm:$0xff]
    %v1399 = vld [vmem:[#allocation2 + $0x350] sm:$0xff]
    %v1400 = vld [vmem:[#allocation2 + $0x358] sm:$0xff]
    %v1401 = vld [vmem:[#allocation2 + $0x360] sm:$0xff]
    %v1402 = vld [vmem:[#allocation2 + $0x368] sm:$0xff]
    %v1403 = vld [vmem:[#allocation2 + $0x370] sm:$0xff]
    %v1404 = vld [vmem:[#allocation2 + $0x378] sm:$0xff]
    %v1405 = vld [vmem:[#allocation2 + $0x380] sm:$0xff]
    %v1406 = vld [vmem:[#allocation2 + $0x388] sm:$0xff]
    %v1407 = vld [vmem:[#allocation2 + $0x390] sm:$0xff]
    %v1408 = vld [vmem:[#allocation2 + $0x398] sm:$0xff]
    %v1409 = vld [vmem:[#allocation2 + $0x3a0] sm:$0xff]
    %v1410 = vld [vmem:[#allocation2 + $0x3a8] sm:$0xff]
    %v1411 = vld [vmem:[#allocation2 + $0x3b0] sm:$0xff]
    %v1412 = vld [vmem:[#allocation2 + $0x3b8] sm:$0xff]
    %v1413 = vld [vmem:[#allocation2 + $0x3c0] sm:$0xff]
    %v1414 = vld [vmem:[#allocation2 + $0x3c8] sm:$0xff]
    %v1415 = vld [vmem:[#allocation2 + $0x3d0] sm:$0xff]
    %v1416 = vld [vmem:[#allocation2 + $0x3d8] sm:$0xff]
    %v1417 = vld [vmem:[#allocation2 + $0x3e0] sm:$0xff]
    %v1418 = vld [vmem:[#allocation2 + $0x3e8] sm:$0xff]
    %v1419 = vld [vmem:[#allocation2 + $0x3f0] sm:$0xff]
    %v1420 = vld [vmem:[#allocation2 + $0x3f8] sm:$0xff]
    %v1421 = vld [vmem:[#allocation2 + $0x400] sm:$0xff]
    %v1422 = vld [vmem:[#allocation2 + $0x408] sm:$0xff]
    %v1423 = vld [vmem:[#allocation2 + $0x410] sm:$0xff]
    %v1424 = vld [vmem:[#allocation2 + $0x418] sm:$0xff]
    %v1425 = vld [vmem:[#allocation2 + $0x420] sm:$0xff]
    %v1426 = vld [vmem:[#allocation2 + $0x428] sm:$0xff]
    %v1427 = vld [vmem:[#allocation2 + $0x430] sm:$0xff]
    %v1428 = vld [vmem:[#allocation2 + $0x438] sm:$0xff]
    %v1429 = vld [vmem:[#allocation2 + $0x440] sm:$0xff]
    %v1430 = vld [vmem:[#allocation2 + $0x448] sm:$0xff]
    %v1431 = vld [vmem:[#allocation2 + $0x450] sm:$0xff]
    %v1432 = vld [vmem:[#allocation2 + $0x458] sm:$0xff]
    %v1433 = vld [vmem:[#allocation2 + $0x460] sm:$0xff]
    %v1434 = vld [vmem:[#allocation2 + $0x468] sm:$0xff]
    %v1435 = vld [vmem:[#allocation2 + $0x470] sm:$0xff]
    %v1436 = vld [vmem:[#allocation2 + $0x478] sm:$0xff]
    %v1437 = vld [vmem:[#allocation2 + $0x480] sm:$0xff]
    %v1438 = vld [vmem:[#allocation2 + $0x488] sm:$0xff]
    %v1439 = vld [vmem:[#allocation2 + $0x490] sm:$0xff]
    %v1440 = vld [vmem:[#allocation2 + $0x498] sm:$0xff]
    %v1441 = vld [vmem:[#allocation2 + $0x4a0] sm:$0xff]
    %v1442 = vld [vmem:[#allocation2 + $0x4a8] sm:$0xff]
    %v1443 = vld [vmem:[#allocation2 + $0x4b0] sm:$0xff]
    %v1444 = vld [vmem:[#allocation2 + $0x4b8] sm:$0xff]
    %v1445 = vld [vmem:[#allocation2 + $0x4c0] sm:$0xff]
    %v1446 = vld [vmem:[#allocation2 + $0x4c8] sm:$0xff]
    %v1447 = vld [vmem:[#allocation2 + $0x4d0] sm:$0xff]
    %v1448 = vld [vmem:[#allocation2 + $0x4d8] sm:$0xff]
    %v1449 = vld [vmem:[#allocation2 + $0x4e0] sm:$0xff]
    %v1450 = vld [vmem:[#allocation2 + $0x4e8] sm:$0xff]
    %v1451 = vld [vmem:[#allocation2 + $0x4f0] sm:$0xff]
    %v1452 = vld [vmem:[#allocation2 + $0x4f8] sm:$0xff]
    %v1453 = vld [vmem:[#allocation2 + $0x500] sm:$0xff]
    %v1454 = vld [vmem:[#allocation2 + $0x508] sm:$0xff]
    %v1455 = vld [vmem:[#allocation2 + $0x510] sm:$0xff]
    %v1456 = vld [vmem:[#allocation2 + $0x518] sm:$0xff]
    %v1457 = vld [vmem:[#allocation2 + $0x520] sm:$0xff]
    %v1458 = vld [vmem:[#allocation2 + $0x528] sm:$0xff]
    %v1459 = vld [vmem:[#allocation2 + $0x530] sm:$0xff]
    %v1460 = vld [vmem:[#allocation2 + $0x538] sm:$0xff]
    %v1461 = vld [vmem:[#allocation2 + $0x540] sm:$0xff]
    %v1462 = vld [vmem:[#allocation2 + $0x548] sm:$0xff]
    %v1463 = vld [vmem:[#allocation2 + $0x550] sm:$0xff]
    %v1464 = vld [vmem:[#allocation2 + $0x558] sm:$0xff]
    %v1465 = vld [vmem:[#allocation2 + $0x560] sm:$0xff]
    %v1466 = vld [vmem:[#allocation2 + $0x568] sm:$0xff]
    %v1467 = vld [vmem:[#allocation2 + $0x570] sm:$0xff]
    %v1468 = vld [vmem:[#allocation2 + $0x578] sm:$0xff]
    %v1469 = vld [vmem:[#allocation2 + $0x580] sm:$0xff]
    %v1470 = vld [vmem:[#allocation2 + $0x588] sm:$0xff]
    %v1471 = vld [vmem:[#allocation2 + $0x590] sm:$0xff]
    %v1472 = vld [vmem:[#allocation2 + $0x598] sm:$0xff]
    %v1473 = vld [vmem:[#allocation2 + $0x5a0] sm:$0xff]
    %v1474 = vld [vmem:[#allocation2 + $0x5a8] sm:$0xff]
    %v1475 = vld [vmem:[#allocation2 + $0x5b0] sm:$0xff]
    %v1476 = vld [vmem:[#allocation2 + $0x5b8] sm:$0xff]
    %v1477 = vld [vmem:[#allocation2 + $0x5c0] sm:$0xff]
    %v1478 = vld [vmem:[#allocation2 + $0x5c8] sm:$0xff]
    %v1479 = vld [vmem:[#allocation2 + $0x5d0] sm:$0xff]
    %v1480 = vld [vmem:[#allocation2 + $0x5d8] sm:$0xff]
    %v1481 = vld [vmem:[#allocation2 + $0x5e0] sm:$0xff]
    %v1482 = vld [vmem:[#allocation2 + $0x5e8] sm:$0xff]
    %v1483 = vld [vmem:[#allocation2 + $0x5f0] sm:$0xff]
    %v1484 = vld [vmem:[#allocation2 + $0x5f8] sm:$0xff]
    %v1485 = vld [vmem:[#allocation2 + $0x600] sm:$0xff]
    %v1486 = vld [vmem:[#allocation2 + $0x608] sm:$0xff]
    %v1487 = vld [vmem:[#allocation2 + $0x610] sm:$0xff]
    %v1488 = vld [vmem:[#allocation2 + $0x618] sm:$0xff]
    %v1489 = vld [vmem:[#allocation2 + $0x620] sm:$0xff]
    %v1490 = vld [vmem:[#allocation2 + $0x628] sm:$0xff]
    %v1491 = vld [vmem:[#allocation2 + $0x630] sm:$0xff]
    %v1492 = vld [vmem:[#allocation2 + $0x638] sm:$0xff]
    %v1493 = vld [vmem:[#allocation2 + $0x640] sm:$0xff]
    %v1494 = vld [vmem:[#allocation2 + $0x648] sm:$0xff]
    %v1495 = vld [vmem:[#allocation2 + $0x650] sm:$0xff]
    %v1496 = vld [vmem:[#allocation2 + $0x658] sm:$0xff]
    %v1497 = vld [vmem:[#allocation2 + $0x660] sm:$0xff]
    %v1498 = vld [vmem:[#allocation2 + $0x668] sm:$0xff]
    %v1499 = vld [vmem:[#allocation2 + $0x670] sm:$0xff]
    %v1500 = vld [vmem:[#allocation2 + $0x678] sm:$0xff]
    %v1501 = vld [vmem:[#allocation2 + $0x680] sm:$0xff]
    %v1502 = vld [vmem:[#allocation2 + $0x688] sm:$0xff]
    %v1503 = vld [vmem:[#allocation2 + $0x690] sm:$0xff]
    %v1504 = vld [vmem:[#allocation2 + $0x698] sm:$0xff]
    %v1505 = vld [vmem:[#allocation2 + $0x6a0] sm:$0xff]
    %v1506 = vld [vmem:[#allocation2 + $0x6a8] sm:$0xff]
    %v1507 = vld [vmem:[#allocation2 + $0x6b0] sm:$0xff]
    %v1508 = vld [vmem:[#allocation2 + $0x6b8] sm:$0xff]
    %v1509 = vld [vmem:[#allocation2 + $0x6c0] sm:$0xff]
    %v1510 = vld [vmem:[#allocation2 + $0x6c8] sm:$0xff]
    %v1511 = vld [vmem:[#allocation2 + $0x6d0] sm:$0xff]
    %v1512 = vld [vmem:[#allocation2 + $0x6d8] sm:$0xff]
    %v1513 = vld [vmem:[#allocation2 + $0x6e0] sm:$0xff]
    %v1514 = vld [vmem:[#allocation2 + $0x6e8] sm:$0xff]
    %v1515 = vld [vmem:[#allocation2 + $0x6f0] sm:$0xff]
    %v1516 = vld [vmem:[#allocation2 + $0x6f8] sm:$0xff]
    %v1517 = vld [vmem:[#allocation2 + $0x700] sm:$0xff]
    %v1518 = vld [vmem:[#allocation2 + $0x708] sm:$0xff]
    %v1519 = vld [vmem:[#allocation2 + $0x710] sm:$0xff]
    %v1520 = vld [vmem:[#allocation2 + $0x718] sm:$0xff]
    %v1521 = vld [vmem:[#allocation2 + $0x720] sm:$0xff]
    %v1522 = vld [vmem:[#allocation2 + $0x728] sm:$0xff]
    %v1523 = vld [vmem:[#allocation2 + $0x730] sm:$0xff]
    %v1524 = vld [vmem:[#allocation2 + $0x738] sm:$0xff]
    %v1525 = vld [vmem:[#allocation2 + $0x740] sm:$0xff]
    %v1526 = vld [vmem:[#allocation2 + $0x748] sm:$0xff]
    %v1527 = vld [vmem:[#allocation2 + $0x750] sm:$0xff]
    %v1528 = vld [vmem:[#allocation2 + $0x758] sm:$0xff]
    %v1529 = vld [vmem:[#allocation2 + $0x760] sm:$0xff]
    %v1530 = vld [vmem:[#allocation2 + $0x768] sm:$0xff]
    %v1531 = vld [vmem:[#allocation2 + $0x770] sm:$0xff]
    %v1532 = vld [vmem:[#allocation2 + $0x778] sm:$0xff]
    %v1533 = vld [vmem:[#allocation2 + $0x780] sm:$0xff]
    %v1534 = vld [vmem:[#allocation2 + $0x788] sm:$0xff]
    %v1535 = vld [vmem:[#allocation2 + $0x790] sm:$0xff]
    %v1536 = vld [vmem:[#allocation2 + $0x798] sm:$0xff]
    %v1537 = vld [vmem:[#allocation2 + $0x7a0] sm:$0xff]
    %v1538 = vld [vmem:[#allocation2 + $0x7a8] sm:$0xff]
    %v1539 = vld [vmem:[#allocation2 + $0x7b0] sm:$0xff]
    %v1540 = vld [vmem:[#allocation2 + $0x7b8] sm:$0xff]
    %v1541 = vld [vmem:[#allocation2 + $0x7c0] sm:$0xff]
    %v1542 = vld [vmem:[#allocation2 + $0x7c8] sm:$0xff]
    %v1543 = vld [vmem:[#allocation2 + $0x7d0] sm:$0xff]
    %v1544 = vld [vmem:[#allocation2 + $0x7d8] sm:$0xff]
    %v1545 = vld [vmem:[#allocation2 + $0x7e0] sm:$0xff]
    %v1546 = vld [vmem:[#allocation2 + $0x7e8] sm:$0xff]
    %v1547 = vld [vmem:[#allocation2 + $0x7f0] sm:$0xff]
    %v1548 = vld [vmem:[#allocation2 + $0x7f8] sm:$0xff]
    %v1549 = vpack.c.bf16 %v1285, %v1285
    %v1550 = vpack.c.bf16 %v1286, %v1286
    %v1551 = vpack.c.bf16 %v1287, %v1287
    %v1552 = vpack.c.bf16 %v1288, %v1288
    %v1553 = vld [vmem:[%s9] ss:$4 sm:$0xff]
    %v1555 = vlaneseq
    %v1556 = vshrl.u32 %v1555, 7
    %v1557 = vsub.s32 0, %v1556
    %v1558 = vrot.slane %v1553, %v1557
    %v1559 = vlaneseq
    %v1560 = vshrl.u32 %v1559, 7
    %v1561 = vsub.s32 1, %v1560
    %v1562 = vrot.slane %v1553, %v1561
    %v1563 = vlaneseq
    %v1564 = vshrl.u32 %v1563, 7
    %v1565 = vsub.s32 2, %v1564
    %v1566 = vrot.slane %v1553, %v1565
    %v1567 = vlaneseq
    %v1568 = vshrl.u32 %v1567, 7
    %v1569 = vsub.s32 3, %v1568
    %v1570 = vrot.slane %v1553, %v1569
    %v1571 = vlaneseq
    %v1572 = vshrl.u32 %v1571, 7
    %v1573 = vsub.s32 4, %v1572
    %v1574 = vrot.slane %v1553, %v1573
    %v1575 = vlaneseq
    %v1576 = vshrl.u32 %v1575, 7
    %v1577 = vsub.s32 5, %v1576
    %v1578 = vrot.slane %v1553, %v1577
    %v1579 = vlaneseq
    %v1580 = vshrl.u32 %v1579, 7
    %v1581 = vsub.s32 6, %v1580
    %v1582 = vrot.slane %v1553, %v1581
    %v1583 = vlaneseq
    %v1584 = vshrl.u32 %v1583, 7
    %v1585 = vsub.s32 7, %v1584
    %v1586 = vrot.slane %v1553, %v1585
    %1595 = vmatprep.subr.bf16.mxu0 %v1294
    %1596 = vmatpush1.bf16.msra.mxu0 %v1293
    %1597 = vmatprep.subr.bf16.mxu0 %v1302
    %1598 = vmatpush1.bf16.msra.mxu0 %v1301
    %1599 = vmatprep.subr.bf16.mxu0 %v1310
    %1600 = vmatpush1.bf16.msra.mxu0 %v1309
    %1601 = vmatprep.subr.bf16.mxu0 %v1318
    %1602 = vmatpush1.bf16.msra.mxu0 %v1317
    %1603 = vmatprep.subr.bf16.mxu0 %v1326
    %1604 = vmatpush1.bf16.msra.mxu0 %v1325
    %1605 = vmatprep.subr.bf16.mxu0 %v1334
    %1606 = vmatpush1.bf16.msra.mxu0 %v1333
    %1607 = vmatprep.subr.bf16.mxu0 %v1342
    %1608 = vmatpush1.bf16.msra.mxu0 %v1341
    %1609 = vmatprep.subr.bf16.mxu0 %v1350
    %1610 = vmatpush1.bf16.msra.mxu0 %v1349
    %1611 = vmatprep.subr.bf16.mxu0 %v1358
    %1612 = vmatpush1.bf16.msra.mxu0 %v1357
    %1613 = vmatprep.subr.bf16.mxu0 %v1366
    %1614 = vmatpush1.bf16.msra.mxu0 %v1365
    %1615 = vmatprep.subr.bf16.mxu0 %v1374
    %1616 = vmatpush1.bf16.msra.mxu0 %v1373
    %1617 = vmatprep.subr.bf16.mxu0 %v1382
    %1618 = vmatpush1.bf16.msra.mxu0 %v1381
    %1619 = vmatprep.subr.bf16.mxu0 %v1390
    %1620 = vmatpush1.bf16.msra.mxu0 %v1389
    %1621 = vmatprep.subr.bf16.mxu0 %v1398
    %1622 = vmatpush1.bf16.msra.mxu0 %v1397
    %1623 = vmatprep.subr.bf16.mxu0 %v1406
    %1624 = vmatpush1.bf16.msra.mxu0 %v1405
    %1625 = vmatprep.subr.bf16.mxu0 %v1414
    %1626 = vmatpush1.bf16.msra.mxu0 %v1413
    %1627 = vmatprep.mubr.bf16.mxu0 %v1550
    %1628 = vmatmul.mubr.bf16.gmra.mrb[0].mxu0 %v1549
    %v1629 = vpop.f32.mrb[0].mxu0
    %v1630 = vadd.f32 %v1558, %v1629
    %v1631 = vpop.f32.mrb[0].mxu0
    %v1632 = vadd.f32 %v1562, %v1631
    %v1633 = vpop.f32.mrb[0].mxu0
    %v1634 = vpop.f32.mrb[0].mxu0
    %1635 = vdwg.mxu0
    %1636 = vmatprep.subr.bf16.mxu0 %v1422
    %1637 = vmatpush1.bf16.msra.mxu0 %v1421
    %1638 = vmatprep.subr.bf16.mxu0 %v1430
    %1639 = vmatpush1.bf16.msra.mxu0 %v1429
    %1640 = vmatprep.subr.bf16.mxu0 %v1438
    %1641 = vmatpush1.bf16.msra.mxu0 %v1437
    %1642 = vmatprep.subr.bf16.mxu0 %v1446
    %1643 = vmatpush1.bf16.msra.mxu0 %v1445
    %1644 = vmatprep.subr.bf16.mxu0 %v1454
    %1645 = vmatpush1.bf16.msra.mxu0 %v1453
    %1646 = vmatprep.subr.bf16.mxu0 %v1462
    %1647 = vmatpush1.bf16.msra.mxu0 %v1461
    %1648 = vmatprep.subr.bf16.mxu0 %v1470
    %1649 = vmatpush1.bf16.msra.mxu0 %v1469
    %1650 = vmatprep.subr.bf16.mxu0 %v1478
    %1651 = vmatpush1.bf16.msra.mxu0 %v1477
    %1652 = vmatprep.subr.bf16.mxu0 %v1486
    %1653 = vmatpush1.bf16.msra.mxu0 %v1485
    %1654 = vmatprep.subr.bf16.mxu0 %v1494
    %1655 = vmatpush1.bf16.msra.mxu0 %v1493
    %1656 = vmatprep.subr.bf16.mxu0 %v1502
    %1657 = vmatpush1.bf16.msra.mxu0 %v1501
    %1658 = vmatprep.subr.bf16.mxu0 %v1510
    %1659 = vmatpush1.bf16.msra.mxu0 %v1509
    %1660 = vmatprep.subr.bf16.mxu0 %v1518
    %1661 = vmatpush1.bf16.msra.mxu0 %v1517
    %1662 = vmatprep.subr.bf16.mxu0 %v1526
    %1663 = vmatpush1.bf16.msra.mxu0 %v1525
    %1664 = vmatprep.subr.bf16.mxu0 %v1534
    %1665 = vmatpush1.bf16.msra.mxu0 %v1533
    %1666 = vmatprep.subr.bf16.mxu0 %v1542
    %1667 = vmatpush1.bf16.msra.mxu0 %v1541
    %1668 = vmatprep.mubr.bf16.mxu0 %v1552
    %1669 = vmatmul.mubr.bf16.gmra.mrb[0].mxu0 %v1551
    %v1670 = vpop.f32.mrb[0].mxu0
    %v1671 = vadd.f32 %v1630, %v1670
    %v1672 = vpop.f32.mrb[0].mxu0
    %v1673 = vadd.f32 %v1632, %v1672
    %v1674 = vpop.f32.mrb[0].mxu0
    %v1675 = vpop.f32.mrb[0].mxu0
    %1676 = vdwg.mxu0
    %1677 = vmatprep.subr.bf16.mxu0 %v1296
    %1678 = vmatpush1.bf16.msra.mxu0 %v1295
    %1679 = vmatprep.subr.bf16.mxu0 %v1304
    %1680 = vmatpush1.bf16.msra.mxu0 %v1303
    %1681 = vmatprep.subr.bf16.mxu0 %v1312
    %1682 = vmatpush1.bf16.msra.mxu0 %v1311
    %1683 = vmatprep.subr.bf16.mxu0 %v1320
    %1684 = vmatpush1.bf16.msra.mxu0 %v1319
    %1685 = vmatprep.subr.bf16.mxu0 %v1328
    %1686 = vmatpush1.bf16.msra.mxu0 %v1327
    %1687 = vmatprep.subr.bf16.mxu0 %v1336
    %1688 = vmatpush1.bf16.msra.mxu0 %v1335
    %1689 = vmatprep.subr.bf16.mxu0 %v1344
    %1690 = vmatpush1.bf16.msra.mxu0 %v1343
    %1691 = vmatprep.subr.bf16.mxu0 %v1352
    %1692 = vmatpush1.bf16.msra.mxu0 %v1351
    %1693 = vmatprep.subr.bf16.mxu0 %v1360
    %1694 = vmatpush1.bf16.msra.mxu0 %v1359
    %1695 = vmatprep.subr.bf16.mxu0 %v1368
    %1696 = vmatpush1.bf16.msra.mxu0 %v1367
    %1697 = vmatprep.subr.bf16.mxu0 %v1376
    %1698 = vmatpush1.bf16.msra.mxu0 %v1375
    %1699 = vmatprep.subr.bf16.mxu0 %v1384
    %1700 = vmatpush1.bf16.msra.mxu0 %v1383
    %1701 = vmatprep.subr.bf16.mxu0 %v1392
    %1702 = vmatpush1.bf16.msra.mxu0 %v1391
    %1703 = vmatprep.subr.bf16.mxu0 %v1400
    %1704 = vmatpush1.bf16.msra.mxu0 %v1399
    %1705 = vmatprep.subr.bf16.mxu0 %v1408
    %1706 = vmatpush1.bf16.msra.mxu0 %v1407
    %1707 = vmatprep.subr.bf16.mxu0 %v1416
    %1708 = vmatpush1.bf16.msra.mxu0 %v1415
    %1709 = vmatprep.mubr.bf16.mxu0 %v1550
    %1710 = vmatmul.mubr.bf16.gmra.mrb[0].mxu0 %v1549
    %v1711 = vpop.f32.mrb[0].mxu0
    %v1712 = vadd.f32 %v1566, %v1711
    %v1713 = vpop.f32.mrb[0].mxu0
    %v1714 = vadd.f32 %v1570, %v1713
    %v1715 = vpop.f32.mrb[0].mxu0
    %v1716 = vpop.f32.mrb[0].mxu0
    %1717 = vdwg.mxu0
    %1718 = vmatprep.subr.bf16.mxu0 %v1424
    %1719 = vmatpush1.bf16.msra.mxu0 %v1423
    %1720 = vmatprep.subr.bf16.mxu0 %v1432
    %1721 = vmatpush1.bf16.msra.mxu0 %v1431
    %1722 = vmatprep.subr.bf16.mxu0 %v1440
    %1723 = vmatpush1.bf16.msra.mxu0 %v1439
    %1724 = vmatprep.subr.bf16.mxu0 %v1448
    %1725 = vmatpush1.bf16.msra.mxu0 %v1447
    %1726 = vmatprep.subr.bf16.mxu0 %v1456
    %1727 = vmatpush1.bf16.msra.mxu0 %v1455
    %1728 = vmatprep.subr.bf16.mxu0 %v1464
    %1729 = vmatpush1.bf16.msra.mxu0 %v1463
    %1730 = vmatprep.subr.bf16.mxu0 %v1472
    %1731 = vmatpush1.bf16.msra.mxu0 %v1471
    %1732 = vmatprep.subr.bf16.mxu0 %v1480
    %1733 = vmatpush1.bf16.msra.mxu0 %v1479
    %1734 = vmatprep.subr.bf16.mxu0 %v1488
    %1735 = vmatpush1.bf16.msra.mxu0 %v1487
    %1736 = vmatprep.subr.bf16.mxu0 %v1496
    %1737 = vmatpush1.bf16.msra.mxu0 %v1495
    %1738 = vmatprep.subr.bf16.mxu0 %v1504
    %1739 = vmatpush1.bf16.msra.mxu0 %v1503
    %1740 = vmatprep.subr.bf16.mxu0 %v1512
    %1741 = vmatpush1.bf16.msra.mxu0 %v1511
    %1742 = vmatprep.subr.bf16.mxu0 %v1520
    %1743 = vmatpush1.bf16.msra.mxu0 %v1519
    %1744 = vmatprep.subr.bf16.mxu0 %v1528
    %1745 = vmatpush1.bf16.msra.mxu0 %v1527
    %1746 = vmatprep.subr.bf16.mxu0 %v1536
    %1747 = vmatpush1.bf16.msra.mxu0 %v1535
    %1748 = vmatprep.subr.bf16.mxu0 %v1544
    %1749 = vmatpush1.bf16.msra.mxu0 %v1543
    %1750 = vmatprep.mubr.bf16.mxu0 %v1552
    %1751 = vmatmul.mubr.bf16.gmra.mrb[0].mxu0 %v1551
    %v1752 = vpop.f32.mrb[0].mxu0
    %v1753 = vadd.f32 %v1712, %v1752
    %v1754 = vpop.f32.mrb[0].mxu0
    %v1755 = vadd.f32 %v1714, %v1754
    %v1756 = vpop.f32.mrb[0].mxu0
    %v1757 = vpop.f32.mrb[0].mxu0
    %1758 = vdwg.mxu0
    %1759 = vmatprep.subr.bf16.mxu0 %v1298
    %1760 = vmatpush1.bf16.msra.mxu0 %v1297
    %1761 = vmatprep.subr.bf16.mxu0 %v1306
    %1762 = vmatpush1.bf16.msra.mxu0 %v1305
    %1763 = vmatprep.subr.bf16.mxu0 %v1314
    %1764 = vmatpush1.bf16.msra.mxu0 %v1313
    %1765 = vmatprep.subr.bf16.mxu0 %v1322
    %1766 = vmatpush1.bf16.msra.mxu0 %v1321
    %1767 = vmatprep.subr.bf16.mxu0 %v1330
    %1768 = vmatpush1.bf16.msra.mxu0 %v1329
    %1769 = vmatprep.subr.bf16.mxu0 %v1338
    %1770 = vmatpush1.bf16.msra.mxu0 %v1337
    %1771 = vmatprep.subr.bf16.mxu0 %v1346
    %1772 = vmatpush1.bf16.msra.mxu0 %v1345
    %1773 = vmatprep.subr.bf16.mxu0 %v1354
    %1774 = vmatpush1.bf16.msra.mxu0 %v1353
    %1775 = vmatprep.subr.bf16.mxu0 %v1362
    %1776 = vmatpush1.bf16.msra.mxu0 %v1361
    %1777 = vmatprep.subr.bf16.mxu0 %v1370
    %1778 = vmatpush1.bf16.msra.mxu0 %v1369
    %1779 = vmatprep.subr.bf16.mxu0 %v1378
    %1780 = vmatpush1.bf16.msra.mxu0 %v1377
    %1781 = vmatprep.subr.bf16.mxu0 %v1386
    %1782 = vmatpush1.bf16.msra.mxu0 %v1385
    %1783 = vmatprep.subr.bf16.mxu0 %v1394
    %1784 = vmatpush1.bf16.msra.mxu0 %v1393
    %1785 = vmatprep.subr.bf16.mxu0 %v1402
    %1786 = vmatpush1.bf16.msra.mxu0 %v1401
    %1787 = vmatprep.subr.bf16.mxu0 %v1410
    %1788 = vmatpush1.bf16.msra.mxu0 %v1409
    %1789 = vmatprep.subr.bf16.mxu0 %v1418
    %1790 = vmatpush1.bf16.msra.mxu0 %v1417
    %1791 = vmatprep.mubr.bf16.mxu0 %v1550
    %1792 = vmatmul.mubr.bf16.gmra.mrb[0].mxu0 %v1549
    %v1793 = vpop.f32.mrb[0].mxu0
    %v1794 = vadd.f32 %v1574, %v1793
    %v1795 = vpop.f32.mrb[0].mxu0
    %v1796 = vadd.f32 %v1578, %v1795
    %v1797 = vpop.f32.mrb[0].mxu0
    %v1798 = vpop.f32.mrb[0].mxu0
    %1799 = vdwg.mxu0
    %1800 = vmatprep.subr.bf16.mxu0 %v1426
    %1801 = vmatpush1.bf16.msra.mxu0 %v1425
    %1802 = vmatprep.subr.bf16.mxu0 %v1434
    %1803 = vmatpush1.bf16.msra.mxu0 %v1433
    %1804 = vmatprep.subr.bf16.mxu0 %v1442
    %1805 = vmatpush1.bf16.msra.mxu0 %v1441
    %1806 = vmatprep.subr.bf16.mxu0 %v1450
    %1807 = vmatpush1.bf16.msra.mxu0 %v1449
    %1808 = vmatprep.subr.bf16.mxu0 %v1458
    %1809 = vmatpush1.bf16.msra.mxu0 %v1457
    %1810 = vmatprep.subr.bf16.mxu0 %v1466
    %1811 = vmatpush1.bf16.msra.mxu0 %v1465
    %1812 = vmatprep.subr.bf16.mxu0 %v1474
    %1813 = vmatpush1.bf16.msra.mxu0 %v1473
    %1814 = vmatprep.subr.bf16.mxu0 %v1482
    %1815 = vmatpush1.bf16.msra.mxu0 %v1481
    %1816 = vmatprep.subr.bf16.mxu0 %v1490
    %1817 = vmatpush1.bf16.msra.mxu0 %v1489
    %1818 = vmatprep.subr.bf16.mxu0 %v1498
    %1819 = vmatpush1.bf16.msra.mxu0 %v1497
    %1820 = vmatprep.subr.bf16.mxu0 %v1506
    %1821 = vmatpush1.bf16.msra.mxu0 %v1505
    %1822 = vmatprep.subr.bf16.mxu0 %v1514
    %1823 = vmatpush1.bf16.msra.mxu0 %v1513
    %1824 = vmatprep.subr.bf16.mxu0 %v1522
    %1825 = vmatpush1.bf16.msra.mxu0 %v1521
    %1826 = vmatprep.subr.bf16.mxu0 %v1530
    %1827 = vmatpush1.bf16.msra.mxu0 %v1529
    %1828 = vmatprep.subr.bf16.mxu0 %v1538
    %1829 = vmatpush1.bf16.msra.mxu0 %v1537
    %1830 = vmatprep.subr.bf16.mxu0 %v1546
    %1831 = vmatpush1.bf16.msra.mxu0 %v1545
    %1832 = vmatprep.mubr.bf16.mxu0 %v1552
    %1833 = vmatmul.mubr.bf16.gmra.mrb[0].mxu0 %v1551
    %v1834 = vpop.f32.mrb[0].mxu0
    %v1835 = vadd.f32 %v1794, %v1834
    %v1836 = vpop.f32.mrb[0].mxu0
    %v1837 = vadd.f32 %v1796, %v1836
    %v1838 = vpop.f32.mrb[0].mxu0
    %v1839 = vpop.f32.mrb[0].mxu0
    %1840 = vdwg.mxu0
    %1841 = vmatprep.subr.bf16.mxu0 %v1300
    %1842 = vmatpush1.bf16.msra.mxu0 %v1299
    %1843 = vmatprep.subr.bf16.mxu0 %v1308
    %1844 = vmatpush1.bf16.msra.mxu0 %v1307
    %1845 = vmatprep.subr.bf16.mxu0 %v1316
    %1846 = vmatpush1.bf16.msra.mxu0 %v1315
    %1847 = vmatprep.subr.bf16.mxu0 %v1324
    %1848 = vmatpush1.bf16.msra.mxu0 %v1323
    %1849 = vmatprep.subr.bf16.mxu0 %v1332
    %1850 = vmatpush1.bf16.msra.mxu0 %v1331
    %1851 = vmatprep.subr.bf16.mxu0 %v1340
    %1852 = vmatpush1.bf16.msra.mxu0 %v1339
    %1853 = vmatprep.subr.bf16.mxu0 %v1348
    %1854 = vmatpush1.bf16.msra.mxu0 %v1347
    %1855 = vmatprep.subr.bf16.mxu0 %v1356
    %1856 = vmatpush1.bf16.msra.mxu0 %v1355
    %1857 = vmatprep.subr.bf16.mxu0 %v1364
    %1858 = vmatpush1.bf16.msra.mxu0 %v1363
    %1859 = vmatprep.subr.bf16.mxu0 %v1372
    %1860 = vmatpush1.bf16.msra.mxu0 %v1371
    %1861 = vmatprep.subr.bf16.mxu0 %v1380
    %1862 = vmatpush1.bf16.msra.mxu0 %v1379
    %1863 = vmatprep.subr.bf16.mxu0 %v1388
    %1864 = vmatpush1.bf16.msra.mxu0 %v1387
    %1865 = vmatprep.subr.bf16.mxu0 %v1396
    %1866 = vmatpush1.bf16.msra.mxu0 %v1395
    %1867 = vmatprep.subr.bf16.mxu0 %v1404
    %1868 = vmatpush1.bf16.msra.mxu0 %v1403
    %1869 = vmatprep.subr.bf16.mxu0 %v1412
    %1870 = vmatpush1.bf16.msra.mxu0 %v1411
    %1871 = vmatprep.subr.bf16.mxu0 %v1420
    %1872 = vmatpush1.bf16.msra.mxu0 %v1419
    %1873 = vmatprep.mubr.bf16.mxu0 %v1550
    %1874 = vmatmul.mubr.bf16.gmra.mrb[0].mxu0 %v1549
    %v1875 = vpop.f32.mrb[0].mxu0
    %v1876 = vadd.f32 %v1582, %v1875
    %v1877 = vpop.f32.mrb[0].mxu0
    %v1878 = vadd.f32 %v1586, %v1877
    %v1879 = vpop.f32.mrb[0].mxu0
    %v1880 = vpop.f32.mrb[0].mxu0
    %1881 = vdwg.mxu0
    %1882 = vmatprep.subr.bf16.mxu0 %v1428
    %1883 = vmatpush1.bf16.msra.mxu0 %v1427
    %1884 = vmatprep.subr.bf16.mxu0 %v1436
    %1885 = vmatpush1.bf16.msra.mxu0 %v1435
    %1886 = vmatprep.subr.bf16.mxu0 %v1444
    %1887 = vmatpush1.bf16.msra.mxu0 %v1443
    %1888 = vmatprep.subr.bf16.mxu0 %v1452
    %1889 = vmatpush1.bf16.msra.mxu0 %v1451
    %1890 = vmatprep.subr.bf16.mxu0 %v1460
    %1891 = vmatpush1.bf16.msra.mxu0 %v1459
    %1892 = vmatprep.subr.bf16.mxu0 %v1468
    %1893 = vmatpush1.bf16.msra.mxu0 %v1467
    %1894 = vmatprep.subr.bf16.mxu0 %v1476
    %1895 = vmatpush1.bf16.msra.mxu0 %v1475
    %1896 = vmatprep.subr.bf16.mxu0 %v1484
    %1897 = vmatpush1.bf16.msra.mxu0 %v1483
    %1898 = vmatprep.subr.bf16.mxu0 %v1492
    %1899 = vmatpush1.bf16.msra.mxu0 %v1491
    %1900 = vmatprep.subr.bf16.mxu0 %v1500
    %1901 = vmatpush1.bf16.msra.mxu0 %v1499
    %1902 = vmatprep.subr.bf16.mxu0 %v1508
    %1903 = vmatpush1.bf16.msra.mxu0 %v1507
    %1904 = vmatprep.subr.bf16.mxu0 %v1516
    %1905 = vmatpush1.bf16.msra.mxu0 %v1515
    %1906 = vmatprep.subr.bf16.mxu0 %v1524
    %1907 = vmatpush1.bf16.msra.mxu0 %v1523
    %1908 = vmatprep.subr.bf16.mxu0 %v1532
    %1909 = vmatpush1.bf16.msra.mxu0 %v1531
    %1910 = vmatprep.subr.bf16.mxu0 %v1540
    %1911 = vmatpush1.bf16.msra.mxu0 %v1539
    %1912 = vmatprep.subr.bf16.mxu0 %v1548
    %1913 = vmatpush1.bf16.msra.mxu0 %v1547
    %1914 = vmatprep.mubr.bf16.mxu0 %v1552
    %1915 = vmatmul.mubr.bf16.gmra.mrb[0].mxu0 %v1551
    %v1916 = vpop.f32.mrb[0].mxu0
    %v1917 = vadd.f32 %v1876, %v1916
    %v1918 = vpop.f32.mrb[0].mxu0
    %v1919 = vadd.f32 %v1878, %v1918
    %v1920 = vpop.f32.mrb[0].mxu0
    %v1921 = vpop.f32.mrb[0].mxu0
    %1922 = vdwg.mxu0
    %v1923 = vrot.slane %v1671, 4
    %v1924 = vadd.f32 %v1671, %v1923
    %v1925 = vrot.slane %v1924, 2
    %v1926 = vadd.f32 %v1924, %v1925
    %v1927 = vrot.slane %v1926, 1
    %v1928 = vadd.f32 %v1926, %v1927
    %v1929 = vrot.slane %v1673, 4
    %v1930 = vadd.f32 %v1673, %v1929
    %v1931 = vrot.slane %v1930, 2
    %v1932 = vadd.f32 %v1930, %v1931
    %v1933 = vrot.slane %v1932, 1
    %v1934 = vadd.f32 %v1932, %v1933
    %v1935 = vrot.slane %v1753, 4
    %v1936 = vadd.f32 %v1753, %v1935
    %v1937 = vrot.slane %v1936, 2
    %v1938 = vadd.f32 %v1936, %v1937
    %v1939 = vrot.slane %v1938, 1
    %v1940 = vadd.f32 %v1938, %v1939
    %v1941 = vrot.slane %v1755, 4
    %v1942 = vadd.f32 %v1755, %v1941
    %v1943 = vrot.slane %v1942, 2
    %v1944 = vadd.f32 %v1942, %v1943
    %v1945 = vrot.slane %v1944, 1
    %v1946 = vadd.f32 %v1944, %v1945
    %v1947 = vrot.slane %v1835, 4
    %v1948 = vadd.f32 %v1835, %v1947
    %v1949 = vrot.slane %v1948, 2
    %v1950 = vadd.f32 %v1948, %v1949
    %v1951 = vrot.slane %v1950, 1
    %v1952 = vadd.f32 %v1950, %v1951
    %v1953 = vrot.slane %v1837, 4
    %v1954 = vadd.f32 %v1837, %v1953
    %v1955 = vrot.slane %v1954, 2
    %v1956 = vadd.f32 %v1954, %v1955
    %v1957 = vrot.slane %v1956, 1
    %v1958 = vadd.f32 %v1956, %v1957
    %v1959 = vrot.slane %v1917, 4
    %v1960 = vadd.f32 %v1917, %v1959
    %v1961 = vrot.slane %v1960, 2
    %v1962 = vadd.f32 %v1960, %v1961
    %v1963 = vrot.slane %v1962, 1
    %v1964 = vadd.f32 %v1962, %v1963
    %v1965 = vrot.slane %v1919, 4
    %v1966 = vadd.f32 %v1919, %v1965
    %v1967 = vrot.slane %v1966, 2
    %v1968 = vadd.f32 %v1966, %v1967
    %v1969 = vrot.slane %v1968, 1
    %v1970 = vadd.f32 %v1968, %v1969
    %v1971 = vmul.f32 %v1928, %v496
    %v1972 = vmul.f32 %v1934, %v496
    %v1973 = vmul.f32 %v1940, %v496
    %v1974 = vmul.f32 %v1946, %v496
    %v1975 = vmul.f32 %v1952, %v496
    %v1976 = vmul.f32 %v1958, %v496
    %v1977 = vmul.f32 %v1964, %v496
    %v1978 = vmul.f32 %v1970, %v496
    %v1979 = vsub.f32 %v1671, %v1971
    %v1980 = vsub.f32 %v1673, %v1972
    %v1981 = vsub.f32 %v1753, %v1973
    %v1982 = vsub.f32 %v1755, %v1974
    %v1983 = vsub.f32 %v1835, %v1975
    %v1984 = vsub.f32 %v1837, %v1976
    %v1985 = vsub.f32 %v1917, %v1977
    %v1986 = vsub.f32 %v1919, %v1978
    %v1987 = vmul.f32 %v1979, %v1979
    %v1988 = vmul.f32 %v1980, %v1980
    %v1989 = vmul.f32 %v1981, %v1981
    %v1990 = vmul.f32 %v1982, %v1982
    %v1991 = vmul.f32 %v1983, %v1983
    %v1992 = vmul.f32 %v1984, %v1984
    %v1993 = vmul.f32 %v1985, %v1985
    %v1994 = vmul.f32 %v1986, %v1986
    %v1995 = vrot.slane %v1987, 4
    %v1996 = vadd.f32 %v1987, %v1995
    %v1997 = vrot.slane %v1996, 2
    %v1998 = vadd.f32 %v1996, %v1997
    %v1999 = vrot.slane %v1998, 1
    %v2000 = vadd.f32 %v1998, %v1999
    %v2001 = vrot.slane %v1988, 4
    %v2002 = vadd.f32 %v1988, %v2001
    %v2003 = vrot.slane %v2002, 2
    %v2004 = vadd.f32 %v2002, %v2003
    %v2005 = vrot.slane %v2004, 1
    %v2006 = vadd.f32 %v2004, %v2005
    %v2007 = vrot.slane %v1989, 4
    %v2008 = vadd.f32 %v1989, %v2007
    %v2009 = vrot.slane %v2008, 2
    %v2010 = vadd.f32 %v2008, %v2009
    %v2011 = vrot.slane %v2010, 1
    %v2012 = vadd.f32 %v2010, %v2011
    %v2013 = vrot.slane %v1990, 4
    %v2014 = vadd.f32 %v1990, %v2013
    %v2015 = vrot.slane %v2014, 2
    %v2016 = vadd.f32 %v2014, %v2015
    %v2017 = vrot.slane %v2016, 1
    %v2018 = vadd.f32 %v2016, %v2017
    %v2019 = vrot.slane %v1991, 4
    %v2020 = vadd.f32 %v1991, %v2019
    %v2021 = vrot.slane %v2020, 2
    %v2022 = vadd.f32 %v2020, %v2021
    %v2023 = vrot.slane %v2022, 1
    %v2024 = vadd.f32 %v2022, %v2023
    %v2025 = vrot.slane %v1992, 4
    %v2026 = vadd.f32 %v1992, %v2025
    %v2027 = vrot.slane %v2026, 2
    %v2028 = vadd.f32 %v2026, %v2027
    %v2029 = vrot.slane %v2028, 1
    %v2030 = vadd.f32 %v2028, %v2029
    %v2031 = vrot.slane %v1993, 4
    %v2032 = vadd.f32 %v1993, %v2031
    %v2033 = vrot.slane %v2032, 2
    %v2034 = vadd.f32 %v2032, %v2033
    %v2035 = vrot.slane %v2034, 1
    %v2036 = vadd.f32 %v2034, %v2035
    %v2037 = vrot.slane %v1994, 4
    %v2038 = vadd.f32 %v1994, %v2037
    %v2039 = vrot.slane %v2038, 2
    %v2040 = vadd.f32 %v2038, %v2039
    %v2041 = vrot.slane %v2040, 1
    %v2042 = vadd.f32 %v2040, %v2041
    %v2043 = vmul.f32 %v2000, %v496
    %v2044 = vmul.f32 %v2006, %v496
    %v2045 = vmul.f32 %v2012, %v496
    %v2046 = vmul.f32 %v2018, %v496
    %v2047 = vmul.f32 %v2024, %v496
    %v2048 = vmul.f32 %v2030, %v496
    %v2049 = vmul.f32 %v2036, %v496
    %v2050 = vmul.f32 %v2042, %v496
    %s2051 = scalar_lea.vmem %s9, 1
    %v2052 = vld [vmem:[%s2051] ss:$4 sm:$0xff]
    %v2053 = vadd.f32 %v2043, 0.8
    %v2054 = vadd.f32 %v2044, 0.8
    %v2055 = vadd.f32 %v2045, 0.8
    %v2056 = vadd.f32 %v2046, 0.8
    %v2057 = vadd.f32 %v2047, 0.8
    %v2058 = vadd.f32 %v2048, 0.8
    %v2059 = vadd.f32 %v2049, 0.8
    %v2060 = vadd.f32 %v2050, 0.8
    %v2061 = vrsqrt.pop %v2053
    %v2062 = vrsqrt.pop %v2054
    %v2063 = vrsqrt.pop %v2055
    %v2064 = vrsqrt.pop %v2056
    %v2065 = vrsqrt.pop %v2057
    %v2066 = vrsqrt.pop %v2058
    %v2067 = vrsqrt.pop %v2059
    %v2068 = vrsqrt.pop %v2060
    %v2077 = vcombine.low %v2061, %v2062
    %v2078 = vcombine.low %v2063, %v2064
    %v2079 = vcombine.low %v2065, %v2066
    %v2080 = vcombine.low %v2067, %v2068
    %v2082 = vunpack.c.l.s4 1966171168
    %v2083 = vunpack.c.0.s8 %v2082
    %v2084 = vlaneseq
    %v2085 = vshrl.u32 %v2084, 7
    %v2086 = vsub.s32 %v2083, %v2085
    %v2087 = vrot.slane %v2077, %v2086
    %v2089 = vunpack.c.l.s4 1966171168
    %v2090 = vunpack.c.0.s8 %v2089
    %v2091 = vlaneseq
    %v2092 = vshrl.u32 %v2091, 7
    %v2093 = vsub.s32 %v2090, %v2092
    %v2094 = vrot.slane %v2078, %v2093
    %v2096 = vunpack.c.l.s4 1966171168
    %v2097 = vunpack.c.0.s8 %v2096
    %v2098 = vlaneseq
    %v2099 = vshrl.u32 %v2098, 7
    %v2100 = vsub.s32 %v2097, %v2099
    %v2101 = vrot.slane %v2079, %v2100
    %v2103 = vunpack.c.l.s4 1966171168
    %v2104 = vunpack.c.0.s8 %v2103
    %v2105 = vlaneseq
    %v2106 = vshrl.u32 %v2105, 7
    %v2107 = vsub.s32 %v2104, %v2106
    %v2108 = vrot.slane %v2080, %v2107
    %v2109 = vcombine.low %v2087, %v2094
    %v2110 = vcombine.low %v2101, %v2108
    %v2112 = vunpack.c.l.s4 1966171168
    %v2113 = vunpack.c.0.s8 %v2112
    %v2114 = vlaneseq
    %v2115 = vshrl.u32 %v2114, 7
    %v2116 = vsub.s32 %v2113, %v2115
    %v2117 = vrot.slane %v2109, %v2116
    %v2119 = vunpack.c.l.s4 1966171168
    %v2120 = vunpack.c.0.s8 %v2119
    %v2121 = vlaneseq
    %v2122 = vshrl.u32 %v2121, 7
    %v2123 = vsub.s32 %v2120, %v2122
    %v2124 = vrot.slane %v2110, %v2123
    %v2125 = vcombine.low %v2117, %v2124
    %v2127 = vmul.f32 %v2052, %v2125
    %s2128 = scalar_lea.vmem %s9, 2
    %v2129 = vld [vmem:[%s2128] ss:$4 sm:$0xff]
    %v2131 = vlaneseq
    %v2132 = vshrl.u32 %v2131, 7
    %v2133 = vsub.s32 0, %v2132
    %v2134 = vrot.slane %v2127, %v2133
    %v2135 = vlaneseq
    %v2136 = vshrl.u32 %v2135, 7
    %v2137 = vsub.s32 1, %v2136
    %v2138 = vrot.slane %v2127, %v2137
    %v2139 = vlaneseq
    %v2140 = vshrl.u32 %v2139, 7
    %v2141 = vsub.s32 2, %v2140
    %v2142 = vrot.slane %v2127, %v2141
    %v2143 = vlaneseq
    %v2144 = vshrl.u32 %v2143, 7
    %v2145 = vsub.s32 3, %v2144
    %v2146 = vrot.slane %v2127, %v2145
    %v2147 = vlaneseq
    %v2148 = vshrl.u32 %v2147, 7
    %v2149 = vsub.s32 4, %v2148
    %v2150 = vrot.slane %v2127, %v2149
    %v2151 = vlaneseq
    %v2152 = vshrl.u32 %v2151, 7
    %v2153 = vsub.s32 5, %v2152
    %v2154 = vrot.slane %v2127, %v2153
    %v2155 = vlaneseq
    %v2156 = vshrl.u32 %v2155, 7
    %v2157 = vsub.s32 6, %v2156
    %v2158 = vrot.slane %v2127, %v2157
    %v2159 = vlaneseq
    %v2160 = vshrl.u32 %v2159, 7
    %v2161 = vsub.s32 7, %v2160
    %v2162 = vrot.slane %v2127, %v2161
    %v2171 = vmul.f32 %v1971, %v2134
    %v2172 = vmul.f32 %v1972, %v2138
    %v2173 = vmul.f32 %v1973, %v2142
    %v2174 = vmul.f32 %v1974, %v2146
    %v2175 = vmul.f32 %v1975, %v2150
    %v2176 = vmul.f32 %v1976, %v2154
    %v2177 = vmul.f32 %v1977, %v2158
    %v2178 = vmul.f32 %v1978, %v2162
    %v2187 = vcombine.low %v2171, %v2172
    %v2188 = vcombine.low %v2173, %v2174
    %v2189 = vcombine.low %v2175, %v2176
    %v2190 = vcombine.low %v2177, %v2178
    %v2192 = vunpack.c.l.s4 1966171168
    %v2193 = vunpack.c.0.s8 %v2192
    %v2194 = vlaneseq
    %v2195 = vshrl.u32 %v2194, 7
    %v2196 = vsub.s32 %v2193, %v2195
    %v2197 = vrot.slane %v2187, %v2196
    %v2199 = vunpack.c.l.s4 1966171168
    %v2200 = vunpack.c.0.s8 %v2199
    %v2201 = vlaneseq
    %v2202 = vshrl.u32 %v2201, 7
    %v2203 = vsub.s32 %v2200, %v2202
    %v2204 = vrot.slane %v2188, %v2203
    %v2206 = vunpack.c.l.s4 1966171168
    %v2207 = vunpack.c.0.s8 %v2206
    %v2208 = vlaneseq
    %v2209 = vshrl.u32 %v2208, 7
    %v2210 = vsub.s32 %v2207, %v2209
    %v2211 = vrot.slane %v2189, %v2210
    %v2213 = vunpack.c.l.s4 1966171168
    %v2214 = vunpack.c.0.s8 %v2213
    %v2215 = vlaneseq
    %v2216 = vshrl.u32 %v2215, 7
    %v2217 = vsub.s32 %v2214, %v2216
    %v2218 = vrot.slane %v2190, %v2217
    %v2219 = vcombine.low %v2197, %v2204
    %v2220 = vcombine.low %v2211, %v2218
    %v2222 = vunpack.c.l.s4 1966171168
    %v2223 = vunpack.c.0.s8 %v2222
    %v2224 = vlaneseq
    %v2225 = vshrl.u32 %v2224, 7
    %v2226 = vsub.s32 %v2223, %v2225
    %v2227 = vrot.slane %v2219, %v2226
    %v2229 = vunpack.c.l.s4 1966171168
    %v2230 = vunpack.c.0.s8 %v2229
    %v2231 = vlaneseq
    %v2232 = vshrl.u32 %v2231, 7
    %v2233 = vsub.s32 %v2230, %v2232
    %v2234 = vrot.slane %v2220, %v2233
    %v2235 = vcombine.low %v2227, %v2234
    %v2237 = vsub.f32 %v2129, %v2235
    %v2238 = vmul.f32 %v1671, %v2134
    %v2239 = vmul.f32 %v1673, %v2138
    %v2240 = vmul.f32 %v1753, %v2142
    %v2241 = vmul.f32 %v1755, %v2146
    %v2242 = vmul.f32 %v1835, %v2150
    %v2243 = vmul.f32 %v1837, %v2154
    %v2244 = vmul.f32 %v1917, %v2158
    %v2245 = vmul.f32 %v1919, %v2162
    %v2247 = vlaneseq
    %v2248 = vshrl.u32 %v2247, 7
    %v2249 = vsub.s32 0, %v2248
    %v2250 = vrot.slane %v2237, %v2249
    %v2251 = vlaneseq
    %v2252 = vshrl.u32 %v2251, 7
    %v2253 = vsub.s32 1, %v2252
    %v2254 = vrot.slane %v2237, %v2253
    %v2255 = vlaneseq
    %v2256 = vshrl.u32 %v2255, 7
    %v2257 = vsub.s32 2, %v2256
    %v2258 = vrot.slane %v2237, %v2257
    %v2259 = vlaneseq
    %v2260 = vshrl.u32 %v2259, 7
    %v2261 = vsub.s32 3, %v2260
    %v2262 = vrot.slane %v2237, %v2261
    %v2263 = vlaneseq
    %v2264 = vshrl.u32 %v2263, 7
    %v2265 = vsub.s32 4, %v2264
    %v2266 = vrot.slane %v2237, %v2265
    %v2267 = vlaneseq
    %v2268 = vshrl.u32 %v2267, 7
    %v2269 = vsub.s32 5, %v2268
    %v2270 = vrot.slane %v2237, %v2269
    %v2271 = vlaneseq
    %v2272 = vshrl.u32 %v2271, 7
    %v2273 = vsub.s32 6, %v2272
    %v2274 = vrot.slane %v2237, %v2273
    %v2275 = vlaneseq
    %v2276 = vshrl.u32 %v2275, 7
    %v2277 = vsub.s32 7, %v2276
    %v2278 = vrot.slane %v2237, %v2277
    %v2287 = vadd.f32 %v2238, %v2250
    %v2288 = vadd.f32 %v2239, %v2254
    %v2289 = vadd.f32 %v2240, %v2258
    %v2290 = vadd.f32 %v2241, %v2262
    %v2291 = vadd.f32 %v2242, %v2266
    %v2292 = vadd.f32 %v2243, %v2270
    %v2293 = vadd.f32 %v2244, %v2274
    %v2294 = vadd.f32 %v2245, %v2278
    %vm2295 = vcmp.gt.f32.partialorder %v2287, 0.0
    %vm2296 = vcmp.gt.f32.partialorder %v2288, 0.0
    %vm2297 = vcmp.gt.f32.partialorder %v2289, 0.0
    %vm2298 = vcmp.gt.f32.partialorder %v2290, 0.0
    %vm2299 = vcmp.gt.f32.partialorder %v2291, 0.0
    %vm2300 = vcmp.gt.f32.partialorder %v2292, 0.0
    %vm2301 = vcmp.gt.f32.partialorder %v2293, 0.0
    %vm2302 = vcmp.gt.f32.partialorder %v2294, 0.0
    %v2303 = vmul.f32 %v2287, 0.2
    %v2304 = vmul.f32 %v2288, 0.2
    %v2305 = vmul.f32 %v2289, 0.2
    %v2306 = vmul.f32 %v2290, 0.2
    %v2307 = vmul.f32 %v2291, 0.2
    %v2308 = vmul.f32 %v2292, 0.2
    %v2309 = vmul.f32 %v2293, 0.2
    %v2310 = vmul.f32 %v2294, 0.2
    %v2311 = vsel %vm2295, %v2287, %v2303
    %v2312 = vsel %vm2296, %v2288, %v2304
    %v2313 = vsel %vm2297, %v2289, %v2305
    %v2314 = vsel %vm2298, %v2290, %v2306
    %v2315 = vsel %vm2299, %v2291, %v2307
    %v2316 = vsel %vm2300, %v2292, %v2308
    %v2317 = vsel %vm2301, %v2293, %v2309
    %v2318 = vsel %vm2302, %v2294, %v2310
    %s2319 = smul.u32 4, 128
    %s2320 = smul.u32 %s2319, 2
    %s2321 = sshll.u32 %s2320, 4
    %2322 = dma.done %s150, %s2321
    %v2323 = vld [vmem:[#allocation3] sm:$0xff]
    %v2324 = vld [vmem:[#allocation3 + $0x8] sm:$0xff]
    %v2325 = vld [vmem:[#allocation3 + $0x10] sm:$0xff]
    %v2326 = vld [vmem:[#allocation3 + $0x18] sm:$0xff]
    %v2327 = vld [vmem:[#allocation3 + $0x20] sm:$0xff]
    %v2328 = vld [vmem:[#allocation3 + $0x28] sm:$0xff]
    %v2329 = vld [vmem:[#allocation3 + $0x30] sm:$0xff]
    %v2330 = vld [vmem:[#allocation3 + $0x38] sm:$0xff]
    %v2331 = vld [vmem:[#allocation3 + $0x40] sm:$0xff]
    %v2332 = vld [vmem:[#allocation3 + $0x48] sm:$0xff]
    %v2333 = vld [vmem:[#allocation3 + $0x50] sm:$0xff]
    %v2334 = vld [vmem:[#allocation3 + $0x58] sm:$0xff]
    %v2335 = vld [vmem:[#allocation3 + $0x60] sm:$0xff]
    %v2336 = vld [vmem:[#allocation3 + $0x68] sm:$0xff]
    %v2337 = vld [vmem:[#allocation3 + $0x70] sm:$0xff]
    %v2338 = vld [vmem:[#allocation3 + $0x78] sm:$0xff]
    %v2339 = vld [vmem:[#allocation3 + $0x80] sm:$0xff]
    %v2340 = vld [vmem:[#allocation3 + $0x88] sm:$0xff]
    %v2341 = vld [vmem:[#allocation3 + $0x90] sm:$0xff]
    %v2342 = vld [vmem:[#allocation3 + $0x98] sm:$0xff]
    %v2343 = vld [vmem:[#allocation3 + $0xa0] sm:$0xff]
    %v2344 = vld [vmem:[#allocation3 + $0xa8] sm:$0xff]
    %v2345 = vld [vmem:[#allocation3 + $0xb0] sm:$0xff]
    %v2346 = vld [vmem:[#allocation3 + $0xb8] sm:$0xff]
    %v2347 = vld [vmem:[#allocation3 + $0xc0] sm:$0xff]
    %v2348 = vld [vmem:[#allocation3 + $0xc8] sm:$0xff]
    %v2349 = vld [vmem:[#allocation3 + $0xd0] sm:$0xff]
    %v2350 = vld [vmem:[#allocation3 + $0xd8] sm:$0xff]
    %v2351 = vld [vmem:[#allocation3 + $0xe0] sm:$0xff]
    %v2352 = vld [vmem:[#allocation3 + $0xe8] sm:$0xff]
    %v2353 = vld [vmem:[#allocation3 + $0xf0] sm:$0xff]
    %v2354 = vld [vmem:[#allocation3 + $0xf8] sm:$0xff]
    %v2355 = vld [vmem:[#allocation3 + $0x100] sm:$0xff]
    %v2356 = vld [vmem:[#allocation3 + $0x108] sm:$0xff]
    %v2357 = vld [vmem:[#allocation3 + $0x110] sm:$0xff]
    %v2358 = vld [vmem:[#allocation3 + $0x118] sm:$0xff]
    %v2359 = vld [vmem:[#allocation3 + $0x120] sm:$0xff]
    %v2360 = vld [vmem:[#allocation3 + $0x128] sm:$0xff]
    %v2361 = vld [vmem:[#allocation3 + $0x130] sm:$0xff]
    %v2362 = vld [vmem:[#allocation3 + $0x138] sm:$0xff]
    %v2363 = vld [vmem:[#allocation3 + $0x140] sm:$0xff]
    %v2364 = vld [vmem:[#allocation3 + $0x148] sm:$0xff]
    %v2365 = vld [vmem:[#allocation3 + $0x150] sm:$0xff]
    %v2366 = vld [vmem:[#allocation3 + $0x158] sm:$0xff]
    %v2367 = vld [vmem:[#allocation3 + $0x160] sm:$0xff]
    %v2368 = vld [vmem:[#allocation3 + $0x168] sm:$0xff]
    %v2369 = vld [vmem:[#allocation3 + $0x170] sm:$0xff]
    %v2370 = vld [vmem:[#allocation3 + $0x178] sm:$0xff]
    %v2371 = vld [vmem:[#allocation3 + $0x180] sm:$0xff]
    %v2372 = vld [vmem:[#allocation3 + $0x188] sm:$0xff]
    %v2373 = vld [vmem:[#allocation3 + $0x190] sm:$0xff]
    %v2374 = vld [vmem:[#allocation3 + $0x198] sm:$0xff]
    %v2375 = vld [vmem:[#allocation3 + $0x1a0] sm:$0xff]
    %v2376 = vld [vmem:[#allocation3 + $0x1a8] sm:$0xff]
    %v2377 = vld [vmem:[#allocation3 + $0x1b0] sm:$0xff]
    %v2378 = vld [vmem:[#allocation3 + $0x1b8] sm:$0xff]
    %v2379 = vld [vmem:[#allocation3 + $0x1c0] sm:$0xff]
    %v2380 = vld [vmem:[#allocation3 + $0x1c8] sm:$0xff]
    %v2381 = vld [vmem:[#allocation3 + $0x1d0] sm:$0xff]
    %v2382 = vld [vmem:[#allocation3 + $0x1d8] sm:$0xff]
    %v2383 = vld [vmem:[#allocation3 + $0x1e0] sm:$0xff]
    %v2384 = vld [vmem:[#allocation3 + $0x1e8] sm:$0xff]
    %v2385 = vld [vmem:[#allocation3 + $0x1f0] sm:$0xff]
    %v2386 = vld [vmem:[#allocation3 + $0x1f8] sm:$0xff]
    %v2387 = vld [vmem:[#allocation3 + $0x200] sm:$0xff]
    %v2388 = vld [vmem:[#allocation3 + $0x208] sm:$0xff]
    %v2389 = vld [vmem:[#allocation3 + $0x210] sm:$0xff]
    %v2390 = vld [vmem:[#allocation3 + $0x218] sm:$0xff]
    %v2391 = vld [vmem:[#allocation3 + $0x220] sm:$0xff]
    %v2392 = vld [vmem:[#allocation3 + $0x228] sm:$0xff]
    %v2393 = vld [vmem:[#allocation3 + $0x230] sm:$0xff]
    %v2394 = vld [vmem:[#allocation3 + $0x238] sm:$0xff]
    %v2395 = vld [vmem:[#allocation3 + $0x240] sm:$0xff]
    %v2396 = vld [vmem:[#allocation3 + $0x248] sm:$0xff]
    %v2397 = vld [vmem:[#allocation3 + $0x250] sm:$0xff]
    %v2398 = vld [vmem:[#allocation3 + $0x258] sm:$0xff]
    %v2399 = vld [vmem:[#allocation3 + $0x260] sm:$0xff]
    %v2400 = vld [vmem:[#allocation3 + $0x268] sm:$0xff]
    %v2401 = vld [vmem:[#allocation3 + $0x270] sm:$0xff]
    %v2402 = vld [vmem:[#allocation3 + $0x278] sm:$0xff]
    %v2403 = vld [vmem:[#allocation3 + $0x280] sm:$0xff]
    %v2404 = vld [vmem:[#allocation3 + $0x288] sm:$0xff]
    %v2405 = vld [vmem:[#allocation3 + $0x290] sm:$0xff]
    %v2406 = vld [vmem:[#allocation3 + $0x298] sm:$0xff]
    %v2407 = vld [vmem:[#allocation3 + $0x2a0] sm:$0xff]
    %v2408 = vld [vmem:[#allocation3 + $0x2a8] sm:$0xff]
    %v2409 = vld [vmem:[#allocation3 + $0x2b0] sm:$0xff]
    %v2410 = vld [vmem:[#allocation3 + $0x2b8] sm:$0xff]
    %v2411 = vld [vmem:[#allocation3 + $0x2c0] sm:$0xff]
    %v2412 = vld [vmem:[#allocation3 + $0x2c8] sm:$0xff]
    %v2413 = vld [vmem:[#allocation3 + $0x2d0] sm:$0xff]
    %v2414 = vld [vmem:[#allocation3 + $0x2d8] sm:$0xff]
    %v2415 = vld [vmem:[#allocation3 + $0x2e0] sm:$0xff]
    %v2416 = vld [vmem:[#allocation3 + $0x2e8] sm:$0xff]
    %v2417 = vld [vmem:[#allocation3 + $0x2f0] sm:$0xff]
    %v2418 = vld [vmem:[#allocation3 + $0x2f8] sm:$0xff]
    %v2419 = vld [vmem:[#allocation3 + $0x300] sm:$0xff]
    %v2420 = vld [vmem:[#allocation3 + $0x308] sm:$0xff]
    %v2421 = vld [vmem:[#allocation3 + $0x310] sm:$0xff]
    %v2422 = vld [vmem:[#allocation3 + $0x318] sm:$0xff]
    %v2423 = vld [vmem:[#allocation3 + $0x320] sm:$0xff]
    %v2424 = vld [vmem:[#allocation3 + $0x328] sm:$0xff]
    %v2425 = vld [vmem:[#allocation3 + $0x330] sm:$0xff]
    %v2426 = vld [vmem:[#allocation3 + $0x338] sm:$0xff]
    %v2427 = vld [vmem:[#allocation3 + $0x340] sm:$0xff]
    %v2428 = vld [vmem:[#allocation3 + $0x348] sm:$0xff]
    %v2429 = vld [vmem:[#allocation3 + $0x350] sm:$0xff]
    %v2430 = vld [vmem:[#allocation3 + $0x358] sm:$0xff]
    %v2431 = vld [vmem:[#allocation3 + $0x360] sm:$0xff]
    %v2432 = vld [vmem:[#allocation3 + $0x368] sm:$0xff]
    %v2433 = vld [vmem:[#allocation3 + $0x370] sm:$0xff]
    %v2434 = vld [vmem:[#allocation3 + $0x378] sm:$0xff]
    %v2435 = vld [vmem:[#allocation3 + $0x380] sm:$0xff]
    %v2436 = vld [vmem:[#allocation3 + $0x388] sm:$0xff]
    %v2437 = vld [vmem:[#allocation3 + $0x390] sm:$0xff]
    %v2438 = vld [vmem:[#allocation3 + $0x398] sm:$0xff]
    %v2439 = vld [vmem:[#allocation3 + $0x3a0] sm:$0xff]
    %v2440 = vld [vmem:[#allocation3 + $0x3a8] sm:$0xff]
    %v2441 = vld [vmem:[#allocation3 + $0x3b0] sm:$0xff]
    %v2442 = vld [vmem:[#allocation3 + $0x3b8] sm:$0xff]
    %v2443 = vld [vmem:[#allocation3 + $0x3c0] sm:$0xff]
    %v2444 = vld [vmem:[#allocation3 + $0x3c8] sm:$0xff]
    %v2445 = vld [vmem:[#allocation3 + $0x3d0] sm:$0xff]
    %v2446 = vld [vmem:[#allocation3 + $0x3d8] sm:$0xff]
    %v2447 = vld [vmem:[#allocation3 + $0x3e0] sm:$0xff]
    %v2448 = vld [vmem:[#allocation3 + $0x3e8] sm:$0xff]
    %v2449 = vld [vmem:[#allocation3 + $0x3f0] sm:$0xff]
    %v2450 = vld [vmem:[#allocation3 + $0x3f8] sm:$0xff]
    %v2451 = vpack.c.bf16 %v2311, %v2311
    %v2452 = vpack.c.bf16 %v2312, %v2312
    %v2453 = vpack.c.bf16 %v2313, %v2313
    %v2454 = vpack.c.bf16 %v2314, %v2314
    %v2455 = vpack.c.bf16 %v2315, %v2315
    %v2456 = vpack.c.bf16 %v2316, %v2316
    %v2457 = vpack.c.bf16 %v2317, %v2317
    %v2458 = vpack.c.bf16 %v2318, %v2318
    %v2459 = vld [vmem:[%s11] sm:$0x3]
    %v2461 = vlaneseq
    %v2462 = vshrl.u32 %v2461, 7
    %v2463 = vsub.s32 0, %v2462
    %v2464 = vrot.slane %v2459, %v2463
    %v2465 = vlaneseq
    %v2466 = vshrl.u32 %v2465, 7
    %v2467 = vsub.s32 1, %v2466
    %v2468 = vrot.slane %v2459, %v2467
    %2471 = vmatprep.subr.bf16.mxu0 %v2324
    %2472 = vmatpush1.bf16.msra.mxu0 %v2323
    %2473 = vmatprep.subr.bf16.mxu0 %v2326
    %2474 = vmatpush1.bf16.msra.mxu0 %v2325
    %2475 = vmatprep.subr.bf16.mxu0 %v2328
    %2476 = vmatpush1.bf16.msra.mxu0 %v2327
    %2477 = vmatprep.subr.bf16.mxu0 %v2330
    %2478 = vmatpush1.bf16.msra.mxu0 %v2329
    %2479 = vmatprep.subr.bf16.mxu0 %v2332
    %2480 = vmatpush1.bf16.msra.mxu0 %v2331
    %2481 = vmatprep.subr.bf16.mxu0 %v2334
    %2482 = vmatpush1.bf16.msra.mxu0 %v2333
    %2483 = vmatprep.subr.bf16.mxu0 %v2336
    %2484 = vmatpush1.bf16.msra.mxu0 %v2335
    %2485 = vmatprep.subr.bf16.mxu0 %v2338
    %2486 = vmatpush1.bf16.msra.mxu0 %v2337
    %2487 = vmatprep.subr.bf16.mxu0 %v2340
    %2488 = vmatpush1.bf16.msra.mxu0 %v2339
    %2489 = vmatprep.subr.bf16.mxu0 %v2342
    %2490 = vmatpush1.bf16.msra.mxu0 %v2341
    %2491 = vmatprep.subr.bf16.mxu0 %v2344
    %2492 = vmatpush1.bf16.msra.mxu0 %v2343
    %2493 = vmatprep.subr.bf16.mxu0 %v2346
    %2494 = vmatpush1.bf16.msra.mxu0 %v2345
    %2495 = vmatprep.subr.bf16.mxu0 %v2348
    %2496 = vmatpush1.bf16.msra.mxu0 %v2347
    %2497 = vmatprep.subr.bf16.mxu0 %v2350
    %2498 = vmatpush1.bf16.msra.mxu0 %v2349
    %2499 = vmatprep.subr.bf16.mxu0 %v2352
    %2500 = vmatpush1.bf16.msra.mxu0 %v2351
    %2501 = vmatprep.subr.bf16.mxu0 %v2354
    %2502 = vmatpush1.bf16.msra.mxu0 %v2353
    %2503 = vmatprep.mubr.bf16.mxu0 %v2452
    %2504 = vmatmul.mubr.bf16.gmra.mrb[0].mxu0 %v2451
    %v2505 = vpop.f32.mrb[0].mxu0
    %v2506 = vadd.f32 %v2464, %v2505
    %v2507 = vpop.f32.mrb[0].mxu0
    %v2508 = vadd.f32 %v2468, %v2507
    %v2509 = vpop.f32.mrb[0].mxu0
    %v2510 = vpop.f32.mrb[0].mxu0
    %2511 = vdwg.mxu0
    %2512 = vmatprep.subr.bf16.mxu0 %v2356
    %2513 = vmatpush1.bf16.msra.mxu0 %v2355
    %2514 = vmatprep.subr.bf16.mxu0 %v2358
    %2515 = vmatpush1.bf16.msra.mxu0 %v2357
    %2516 = vmatprep.subr.bf16.mxu0 %v2360
    %2517 = vmatpush1.bf16.msra.mxu0 %v2359
    %2518 = vmatprep.subr.bf16.mxu0 %v2362
    %2519 = vmatpush1.bf16.msra.mxu0 %v2361
    %2520 = vmatprep.subr.bf16.mxu0 %v2364
    %2521 = vmatpush1.bf16.msra.mxu0 %v2363
    %2522 = vmatprep.subr.bf16.mxu0 %v2366
    %2523 = vmatpush1.bf16.msra.mxu0 %v2365
    %2524 = vmatprep.subr.bf16.mxu0 %v2368
    %2525 = vmatpush1.bf16.msra.mxu0 %v2367
    %2526 = vmatprep.subr.bf16.mxu0 %v2370
    %2527 = vmatpush1.bf16.msra.mxu0 %v2369
    %2528 = vmatprep.subr.bf16.mxu0 %v2372
    %2529 = vmatpush1.bf16.msra.mxu0 %v2371
    %2530 = vmatprep.subr.bf16.mxu0 %v2374
    %2531 = vmatpush1.bf16.msra.mxu0 %v2373
    %2532 = vmatprep.subr.bf16.mxu0 %v2376
    %2533 = vmatpush1.bf16.msra.mxu0 %v2375
    %2534 = vmatprep.subr.bf16.mxu0 %v2378
    %2535 = vmatpush1.bf16.msra.mxu0 %v2377
    %2536 = vmatprep.subr.bf16.mxu0 %v2380
    %2537 = vmatpush1.bf16.msra.mxu0 %v2379
    %2538 = vmatprep.subr.bf16.mxu0 %v2382
    %2539 = vmatpush1.bf16.msra.mxu0 %v2381
    %2540 = vmatprep.subr.bf16.mxu0 %v2384
    %2541 = vmatpush1.bf16.msra.mxu0 %v2383
    %2542 = vmatprep.subr.bf16.mxu0 %v2386
    %2543 = vmatpush1.bf16.msra.mxu0 %v2385
    %2544 = vmatprep.mubr.bf16.mxu0 %v2454
    %2545 = vmatmul.mubr.bf16.gmra.mrb[0].mxu0 %v2453
    %v2546 = vpop.f32.mrb[0].mxu0
    %v2547 = vadd.f32 %v2506, %v2546
    %v2548 = vpop.f32.mrb[0].mxu0
    %v2549 = vadd.f32 %v2508, %v2548
    %v2550 = vpop.f32.mrb[0].mxu0
    %v2551 = vpop.f32.mrb[0].mxu0
    %2552 = vdwg.mxu0
    %2553 = vmatprep.subr.bf16.mxu0 %v2388
    %2554 = vmatpush1.bf16.msra.mxu0 %v2387
    %2555 = vmatprep.subr.bf16.mxu0 %v2390
    %2556 = vmatpush1.bf16.msra.mxu0 %v2389
    %2557 = vmatprep.subr.bf16.mxu0 %v2392
    %2558 = vmatpush1.bf16.msra.mxu0 %v2391
    %2559 = vmatprep.subr.bf16.mxu0 %v2394
    %2560 = vmatpush1.bf16.msra.mxu0 %v2393
    %2561 = vmatprep.subr.bf16.mxu0 %v2396
    %2562 = vmatpush1.bf16.msra.mxu0 %v2395
    %2563 = vmatprep.subr.bf16.mxu0 %v2398
    %2564 = vmatpush1.bf16.msra.mxu0 %v2397
    %2565 = vmatprep.subr.bf16.mxu0 %v2400
    %2566 = vmatpush1.bf16.msra.mxu0 %v2399
    %2567 = vmatprep.subr.bf16.mxu0 %v2402
    %2568 = vmatpush1.bf16.msra.mxu0 %v2401
    %2569 = vmatprep.subr.bf16.mxu0 %v2404
    %2570 = vmatpush1.bf16.msra.mxu0 %v2403
    %2571 = vmatprep.subr.bf16.mxu0 %v2406
    %2572 = vmatpush1.bf16.msra.mxu0 %v2405
    %2573 = vmatprep.subr.bf16.mxu0 %v2408
    %2574 = vmatpush1.bf16.msra.mxu0 %v2407
    %2575 = vmatprep.subr.bf16.mxu0 %v2410
    %2576 = vmatpush1.bf16.msra.mxu0 %v2409
    %2577 = vmatprep.subr.bf16.mxu0 %v2412
    %2578 = vmatpush1.bf16.msra.mxu0 %v2411
    %2579 = vmatprep.subr.bf16.mxu0 %v2414
    %2580 = vmatpush1.bf16.msra.mxu0 %v2413
    %2581 = vmatprep.subr.bf16.mxu0 %v2416
    %2582 = vmatpush1.bf16.msra.mxu0 %v2415
    %2583 = vmatprep.subr.bf16.mxu0 %v2418
    %2584 = vmatpush1.bf16.msra.mxu0 %v2417
    %2585 = vmatprep.mubr.bf16.mxu0 %v2456
    %2586 = vmatmul.mubr.bf16.gmra.mrb[0].mxu0 %v2455
    %v2587 = vpop.f32.mrb[0].mxu0
    %v2588 = vadd.f32 %v2547, %v2587
    %v2589 = vpop.f32.mrb[0].mxu0
    %v2590 = vadd.f32 %v2549, %v2589
    %v2591 = vpop.f32.mrb[0].mxu0
    %v2592 = vpop.f32.mrb[0].mxu0
    %2593 = vdwg.mxu0
    %2594 = vmatprep.subr.bf16.mxu0 %v2420
    %2595 = vmatpush1.bf16.msra.mxu0 %v2419
    %2596 = vmatprep.subr.bf16.mxu0 %v2422
    %2597 = vmatpush1.bf16.msra.mxu0 %v2421
    %2598 = vmatprep.subr.bf16.mxu0 %v2424
    %2599 = vmatpush1.bf16.msra.mxu0 %v2423
    %2600 = vmatprep.subr.bf16.mxu0 %v2426
    %2601 = vmatpush1.bf16.msra.mxu0 %v2425
    %2602 = vmatprep.subr.bf16.mxu0 %v2428
    %2603 = vmatpush1.bf16.msra.mxu0 %v2427
    %2604 = vmatprep.subr.bf16.mxu0 %v2430
    %2605 = vmatpush1.bf16.msra.mxu0 %v2429
    %2606 = vmatprep.subr.bf16.mxu0 %v2432
    %2607 = vmatpush1.bf16.msra.mxu0 %v2431
    %2608 = vmatprep.subr.bf16.mxu0 %v2434
    %2609 = vmatpush1.bf16.msra.mxu0 %v2433
    %2610 = vmatprep.subr.bf16.mxu0 %v2436
    %2611 = vmatpush1.bf16.msra.mxu0 %v2435
    %2612 = vmatprep.subr.bf16.mxu0 %v2438
    %2613 = vmatpush1.bf16.msra.mxu0 %v2437
    %2614 = vmatprep.subr.bf16.mxu0 %v2440
    %2615 = vmatpush1.bf16.msra.mxu0 %v2439
    %2616 = vmatprep.subr.bf16.mxu0 %v2442
    %2617 = vmatpush1.bf16.msra.mxu0 %v2441
    %2618 = vmatprep.subr.bf16.mxu0 %v2444
    %2619 = vmatpush1.bf16.msra.mxu0 %v2443
    %2620 = vmatprep.subr.bf16.mxu0 %v2446
    %2621 = vmatpush1.bf16.msra.mxu0 %v2445
    %2622 = vmatprep.subr.bf16.mxu0 %v2448
    %2623 = vmatpush1.bf16.msra.mxu0 %v2447
    %2624 = vmatprep.subr.bf16.mxu0 %v2450
    %2625 = vmatpush1.bf16.msra.mxu0 %v2449
    %2626 = vmatprep.mubr.bf16.mxu0 %v2458
    %2627 = vmatmul.mubr.bf16.gmra.mrb[0].mxu0 %v2457
    %v2628 = vpop.f32.mrb[0].mxu0
    %v2629 = vadd.f32 %v2588, %v2628
    %v2630 = vpop.f32.mrb[0].mxu0
    %v2631 = vadd.f32 %v2590, %v2630
    %v2632 = vpop.f32.mrb[0].mxu0
    %v2633 = vpop.f32.mrb[0].mxu0
    %2634 = vdwg.mxu0
    %v2635 = vtanh.pop %v2629
    %v2636 = vtanh.pop %v2631
    %2637 = vst [vmem:[#allocation16] sm:$0xff] %v2635
    %2638 = vst [vmem:[#allocation16 + $0x8] sm:$0xff] %v2636
    // Predicated region
    $region66: #{tpu_custom_call.1} parent=1 // pred_check
      _
    $region67: #{tpu_custom_call.1} parent=1 // pred_check_branch
      %2640 = sbr.rel (0) target = $region69
    $region68: #{tpu_custom_call.1} parent=1 // pred_region
      %s2642 = ssub.s32 256, 256
      %2643 = vsyncadd [#allocation7], %s2642
      %s2645 = sshll.u32 [#allocation16], 4
      %s2646 = int_to_ptr.vmem [resolvable:$true] %s2645
      %2648 = dma.vmem_to_hbm [thread:$0]  %s2646, 256, %s12, [#allocation7]
    $region69: #{tpu_custom_call.1} parent=1 // pred_fallthru
      _
    // Predicated region
    $region70: #{tpu_custom_call.1} parent=1 // pred_check
      _
    $region71: #{tpu_custom_call.1} parent=1 // pred_check_branch
      %2650 = sbr.rel (0) target = $region73
    $region72: #{tpu_custom_call.1} parent=1 // pred_region
      %2651 = dma.done [#allocation7], 256
    $region73: #{tpu_custom_call.1} parent=1 // pred_fallthru
      _
    %2652 = vsyncpa [#allocation6], 1
    %2653 = vsyncpa [#allocation9], 1
    %2654 = vsyncpa [#allocation12], 1
    %2655 = vsyncpa [#allocation15], 1
    %2656 = vsyncpa [#allocation7], 1
  %2657 = vsyncmov [#allocation4]
  %s2658 = vpop.sfrf %2657
  %p2659 = scmp.eq.s32.totalorder %s2658, 0
  %p2660 = pneg %p2659
  %2662 = shalt.err (%p2660)
  %s2663 = scalar_lea.sflag [#allocation4], 1
  %2664 = vsyncmov %s2663
  %s2665 = vpop.sfrf %2664
  %p2666 = scmp.eq.s32.totalorder %s2665, 0
  %p2667 = pneg %p2666
  %2669 = shalt.err (%p2667)

</llo_original>
